<compile_context>
chip_gen: v6e
topology: v6e:2x2x1
jax: 0.10.0
libtpu: 0.0.40
codegen_flags: <defaults>
</compile_context>

<pallas_src>
import functools

import jax
import jax.numpy as jnp
from jax.experimental import pallas as pl
from jax.experimental.pallas import tpu as pltpu


# Pointwise weights are pre-cast to bf16 (MXU-native) in the wrapper only at
# production widths; below this the tiny matmul stays f32 (no cast traffic).
_MXU_BF16_MIN_C = 64


# ---------------------------------------------------------------------------
# In-kernel helpers
# ---------------------------------------------------------------------------
def _depthwise3x3_relu(pad_ref, wdv, bdv, H, W):
    """3x3 depthwise conv (stride 1, pad 1) + bias + ReLU from the padded scratch.

    pad_ref : (1, H+2, W+2, C) f32 VMEM scratch with a zero 1-pixel rim.
    wdv     : (3, 3, C) value,  bdv : (1, C) value.
    Returns a (1, H, W, C) f32 value.
    """
    C = wdv.shape[-1]
    acc = None
    # [taps] dw outer: each W-shifted plane is read ONCE (one unaligned
    # sublane slice) and reused for the 3 H shifts, which are free
    # leading-axis value slices -> 3 unaligned reads per stage instead of 9.
    for dw in range(3):
        col = pad_ref[:, :, pl.ds(dw, W), :]             # (1, H+2, W, C)
        for dh in range(3):
            tap = col[:, dh:dh + H, :, :] * wdv[dh, dw, :]
            acc = tap if acc is None else acc + tap
    return jnp.maximum(acc + bdv.reshape(1, 1, 1, C), 0.0)


def _pointwise_relu(a, wp, bp):
    """1x1 pointwise conv + bias + ReLU as one MXU matmul (f32 accumulation).

    a  : (1, H, W, C) f32 value.
    wp : (C, N) value -- f32 at small C, bf16 (pre-cast in the wrapper) at
         production widths; no per-invocation weight casts inside the kernel.
    bp : (1, N) f32 value.
    """
    _, H, W, C = a.shape
    N = wp.shape[-1]
    a2 = a.reshape(H * W, C).astype(wp.dtype)            # minor dim unchanged
    y = jnp.dot(a2, wp, preferred_element_type=jnp.float32) + bp
    return jnp.maximum(y, 0.0).reshape(1, H, W, N)


# ---------------------------------------------------------------------------
# Fused kernel body
# ---------------------------------------------------------------------------
def _decoder_block_kernel(has_conv, H, W,
                          hin_ref,
                          wd1, bd1, wp1, bp1,
                          wd2, bd2, wp2, bp2,
                          *rest):
    if has_conv:
        wdc, bdc, wpc, bpc, o_ref, pad_ref = rest
    else:
        o_ref, pad_ref = rest

    C = hin_ref.shape[-1]

    # [rim] Zero only the 1-pixel rim; the interior is always fully
    # overwritten below, so the rim stays zero for both 3x3 stages.  Re-done
    # every grid step so the "parallel" batch axis carries no cross-iteration
    # scratch dependence.
    zrow = jnp.zeros((1, 1, W + 2, C), jnp.float32)
    zcol = jnp.zeros((1, H + 2, 1, C), jnp.float32)
    pad_ref[:, 0:1, :, :] = zrow
    pad_ref[:, H + 1:H + 2, :, :] = zrow
    pad_ref[:, :, 0:1, :] = zcol
    pad_ref[:, :, W + 1:W + 2, :] = zcol

    # [concat] caller already concatenated x/skip along channels -> one
    # full-C (unmasked-lane) interior store.
    pad_ref[:, pl.ds(1, H), pl.ds(1, W), :] = hin_ref[...].astype(jnp.float32)

    # ResBlock = DSConv3x3 -> DSConv3x3 -> + input
    a1 = _depthwise3x3_relu(pad_ref, wd1[...], bd1[...], H, W)
    h1 = _pointwise_relu(a1, wp1[...], bp1[...])

    pad_ref[:, pl.ds(1, H), pl.ds(1, W), :] = h1          # reuse padded scratch
    a2 = _depthwise3x3_relu(pad_ref, wd2[...], bd2[...], H, W)
    h2 = _pointwise_relu(a2, wp2[...], bp2[...])

    # [resid] residual input re-read from the UNCHANGED input block (the
    # padded scratch holds h1 by now, so it must NOT be used here); nothing
    # is held live in vregs across both stages.
    r = h2 + hin_ref[...].astype(jnp.float32)

    if has_conv:
        # 1x1 DSConv (per-channel scale+bias -> ReLU -> pointwise -> ReLU)
        # applied BEFORE the nearest-2x upsample (exact commutation).
        a3 = jnp.maximum(r * wdc[...].reshape(1, 1, 1, C)
                         + bdc[...].reshape(1, 1, 1, C), 0.0)
        y = _pointwise_relu(a3, wpc[...], bpc[...])
        o_ref[...] = y.astype(o_ref.dtype)
    else:
        o_ref[...] = r.astype(o_ref.dtype)


# ---------------------------------------------------------------------------
# pallas_call wrapper (single fused launch, batch-parallel grid)
# ---------------------------------------------------------------------------
def _const_spec(shape):
    zeros = (0,) * len(shape)
    return pl.BlockSpec(shape, lambda b, _z=zeros: _z)


def _decoder_block_call(h, params, is_last_block):
    """h: channel-concatenated NHWC input (B, H, W, C)."""
    B, H, W, C = h.shape
    r = params["res"]

    # [pw] pre-cast pointwise weights ONCE in the wrapper at production
    # widths; keep f32 at small C (no cast traffic for a single MXU pass).
    if C >= _MXU_BF16_MIN_C:
        wcast = lambda w: w.astype(jnp.bfloat16)
    else:
        wcast = lambda w: w

    inputs = [h,
              r["wd1"], r["bd1"], wcast(r["wp1"]), r["bp1"],
              r["wd2"], r["bd2"], wcast(r["wp2"]), r["bp2"]]
    in_specs = [pl.BlockSpec((1, H, W, C), lambda b: (b, 0, 0, 0)),
                _const_spec((3, 3, C)), _const_spec((1, C)),
                _const_spec((C, C)), _const_spec((1, C)),
                _const_spec((3, 3, C)), _const_spec((1, C)),
                _const_spec((C, C)), _const_spec((1, C))]

    if is_last_block:
        out_c = C
    else:
        c = params["conv"]
        out_c = c["wp"].shape[1]
        inputs += [c["wd"], c["bd"], wcast(c["wp"]), c["bp"]]
        in_specs += [_const_spec((1, C)), _const_spec((1, C)),
                     _const_spec((C, out_c)), _const_spec((1, out_c))]

    kernel = functools.partial(_decoder_block_kernel, not is_last_block, H, W)
    return pl.pallas_call(
        kernel,
        out_shape=jax.ShapeDtypeStruct((B, H, W, out_c), h.dtype),
        grid=(B,),
        in_specs=in_specs,
        out_specs=pl.BlockSpec((1, H, W, out_c), lambda b: (b, 0, 0, 0)),
        scratch_shapes=[pltpu.VMEM((1, H + 2, W + 2, C), jnp.float32)],
        compiler_params=pltpu.CompilerParams(
            # [grid] batch elements are independent -> "parallel" (v7x 2 TCs).
            dimension_semantics=("parallel",),
            # [vmem] explicit budget: per-step padded scratch + double-buffered
            # input/output blocks; 32 MiB fits every generation (v7x phys 64).
            vmem_limit_bytes=32 * 1024 * 1024),
    )(*inputs)


# ---------------------------------------------------------------------------
# Public forward passes
# ---------------------------------------------------------------------------
def g1_decoder_block_nhwc(x, skip, params, is_last_block=True):
    """NHWC entry point (preferred: no layout transposes)."""
    # [concat] torch.cat(dim=1) == channel concat in NHWC; pure data movement
    # done as XLA glue so the kernel sees one channel-complete tensor.
    h = jnp.concatenate([x, skip], axis=-1)
    out = _decoder_block_call(h, params, is_last_block)
    if not is_last_block:
        # F.interpolate(scale_factor=2, mode='nearest') AFTER the 1x1 DSConv
        # (exact commutation); pure replication kept as XLA glue.
        # TODO(synk): fuse into the kernel output store (sublane-strided
        # writes) to cut output-side HBM traffic from 6x to 4x.
        B, H, W, N = out.shape
        out = jnp.broadcast_to(out[:, :, None, :, None, :],
                               (B, H, 2, W, 2, N)).reshape(B, 2 * H, 2 * W, N)
    return out


def g1_decoder_block(x_nchw, skip_nchw, params, is_last_block=True):
    """NCHW wrapper matching the PyTorch module interface."""
    x = jnp.transpose(x_nchw, (0, 2, 3, 1))
    s = jnp.transpose(skip_nchw, (0, 2, 3, 1))
    h = g1_decoder_block_nhwc(x, s, params, is_last_block)
    return jnp.transpose(h, (0, 3, 1, 2))


# ---------------------------------------------------------------------------
# Pure-JAX (XLA, f32) reference for correctness checking — follows the
# original PyTorch op order (concat -> resblock -> upsample -> conv).
# ---------------------------------------------------------------------------
def _dsconv_ref(x, wd, bd, wp, bp, ksize, pad):
    C = x.shape[-1]
    k = wd.reshape(ksize, ksize, 1, C)
    y = jax.lax.conv_general_dilated(
        x, k, window_strides=(1, 1), padding=[(pad, pad), (pad, pad)],
        dimension_numbers=("NHWC", "HWIO", "NHWC"), feature_group_count=C)
    y = jax.nn.relu(y + bd.reshape(1, 1, 1, C))
    y = jnp.einsum("bhwc,cd->bhwd", y, wp) + bp.reshape(1, 1, 1, -1)
    return jax.nn.relu(y)


def g1_decoder_block_ref(x_nchw, skip_nchw, params, is_last_block):
    x = jnp.transpose(x_nchw, (0, 2, 3, 1))
    s = jnp.transpose(skip_nchw, (0, 2, 3, 1))
    h = jnp.concatenate([x, s], axis=-1)
    r = params["res"]
    h1 = _dsconv_ref(h, r["wd1"], r["bd1"], r["wp1"], r["bp1"], 3, 1)
    h1 = _dsconv_ref(h1, r["wd2"], r["bd2"], r["wp2"], r["bp2"], 3, 1)
    h = h1 + h
    if not is_last_block:
        h = jnp.repeat(jnp.repeat(h, 2, axis=1), 2, axis=2)
        c = params["conv"]
        h = _dsconv_ref(h, c["wd"], c["bd"], c["wp"], c["bp"], 1, 0)
    return jnp.transpose(h, (0, 3, 1, 2))


# ---------------------------------------------------------------------------
# Deterministic parameter init (shapes follow the nn.Module __init__)
# ---------------------------------------------------------------------------
def init_params(key, in_channels, out_channels, is_last_block):
    ks = jax.random.split(key, 12)

    def w(k, shape, scale=0.2):
        return (scale * jax.random.normal(k, shape)).astype(jnp.float32)

    res = dict(
        wd1=w(ks[0], (3, 3, in_channels)), bd1=w(ks[1], (1, in_channels), 0.05),
        wp1=w(ks[2], (in_channels, in_channels)), bp1=w(ks[3], (1, in_channels), 0.05),
        wd2=w(ks[4], (3, 3, in_channels)), bd2=w(ks[5], (1, in_channels), 0.05),
        wp2=w(ks[6], (in_channels, in_channels)), bp2=w(ks[7], (1, in_channels), 0.05),
    )
    params = {"res": res}
    if not is_last_block:
        params["conv"] = dict(
            wd=w(ks[8], (1, in_channels)), bd=w(ks[9], (1, in_channels), 0.05),
            wp=w(ks[10], (in_channels, out_channels)),
            bp=w(ks[11], (1, out_channels), 0.05),
        )
    return params


if __name__ == "__main__":
    key = jax.random.PRNGKey(0)
    kx, ks, kp = jax.random.split(key, 3)

    B, Cx, H, W = 2, 4, 8, 8          # x and skip each carry Cx channels
    in_channels = 2 * Cx              # channels after torch.cat(dim=1)
    out_channels = 8

    x = jax.random.normal(kx, (B, Cx, H, W), jnp.float32)
    skip = jax.random.normal(ks, (B, Cx, H, W), jnp.float32)

    for is_last in (True, False):
        params = init_params(kp, in_channels, out_channels, is_last)
        out = jax.block_until_ready(g1_decoder_block(x, skip, params, is_last))
        ref = jax.block_until_ready(g1_decoder_block_ref(x, skip, params, is_last))
        assert out.shape == ref.shape, (out.shape, ref.shape)
        # MXU matmul (bf16-rounded operands internally) vs. pure-f32-ish ref.
        assert jnp.allclose(out, ref, atol=2e-2, rtol=2e-2), float(
            jnp.max(jnp.abs(out - ref)))

    print("KERNEL_OK")
</pallas_src>

<mosaic_0001>
module attributes {stable_mosaic.version = 11 : i64} {
  func.func @_decoder_block_kernel(%arg0: i32, %arg1: memref<1x8x8x8xf32, #tpu.memory_space<vmem>>, %arg2: memref<3x3x8xf32, #tpu.memory_space<vmem>>, %arg3: memref<1x8xf32, #tpu.memory_space<vmem>>, %arg4: memref<8x8xf32, #tpu.memory_space<vmem>>, %arg5: memref<1x8xf32, #tpu.memory_space<vmem>>, %arg6: memref<3x3x8xf32, #tpu.memory_space<vmem>>, %arg7: memref<1x8xf32, #tpu.memory_space<vmem>>, %arg8: memref<8x8xf32, #tpu.memory_space<vmem>>, %arg9: memref<1x8xf32, #tpu.memory_space<vmem>>, %arg10: memref<1x8x8x8xf32, #tpu.memory_space<vmem>>, %arg11: memref<1x10x10x8xf32, #tpu.memory_space<vmem>>) attributes {dimension_semantics = [#tpu.dimension_semantics<parallel>], iteration_bounds = array<i64: 2>, scalar_prefetch = 0 : i64, scratch_operands = 1 : i64, tpu.core_type = #tpu.core_type<tc>, window_params = [{transform_indices = @transform_0, window_bounds = array<i64: 1, 8, 8, 8>}, {pipeline_mode = #tpu.pipeline_mode<synchronous>, transform_indices = @transform_1, window_bounds = array<i64: 3, 3, 8>}, {pipeline_mode = #tpu.pipeline_mode<synchronous>, transform_indices = @transform_2, window_bounds = array<i64: 1, 8>}, {pipeline_mode = #tpu.pipeline_mode<synchronous>, transform_indices = @transform_3, window_bounds = array<i64: 8, 8>}, {pipeline_mode = #tpu.pipeline_mode<synchronous>, transform_indices = @transform_4, window_bounds = array<i64: 1, 8>}, {pipeline_mode = #tpu.pipeline_mode<synchronous>, transform_indices = @transform_5, window_bounds = array<i64: 3, 3, 8>}, {pipeline_mode = #tpu.pipeline_mode<synchronous>, transform_indices = @transform_6, window_bounds = array<i64: 1, 8>}, {pipeline_mode = #tpu.pipeline_mode<synchronous>, transform_indices = @transform_7, window_bounds = array<i64: 8, 8>}, {pipeline_mode = #tpu.pipeline_mode<synchronous>, transform_indices = @transform_8, window_bounds = array<i64: 1, 8>}, {transform_indices = @transform_9, window_bounds = array<i64: 1, 8, 8, 8>}]} {
    %cst = arith.constant 0.000000e+00 : f32
    %0 = vector.broadcast %cst : f32 to vector<1x1x10x8xf32>
    %cst_0 = arith.constant 0.000000e+00 : f32
    %1 = vector.broadcast %cst_0 : f32 to vector<1x10x1x8xf32>
    %c0 = arith.constant 0 : index
    %c0_1 = arith.constant 0 : index
    %c0_2 = arith.constant 0 : index
    %c0_3 = arith.constant 0 : index
    %2 = vector.load %arg11[%c0, %c0_1, %c0_2, %c0_3] : memref<1x10x10x8xf32, #tpu.memory_space<vmem>>, vector<1x1x10x8xf32>
    tpu.vector_store %arg11[%c0, %c0_1, %c0_2, %c0_3], %0 {strides = array<i32>} : memref<1x10x10x8xf32, #tpu.memory_space<vmem>>, vector<1x1x10x8xf32>,
    %c0_4 = arith.constant 0 : index
    %c9 = arith.constant 9 : index
    %c0_5 = arith.constant 0 : index
    %c0_6 = arith.constant 0 : index
    %3 = vector.load %arg11[%c0_4, %c9, %c0_5, %c0_6] : memref<1x10x10x8xf32, #tpu.memory_space<vmem>>, vector<1x1x10x8xf32>
    tpu.vector_store %arg11[%c0_4, %c9, %c0_5, %c0_6], %0 {strides = array<i32>} : memref<1x10x10x8xf32, #tpu.memory_space<vmem>>, vector<1x1x10x8xf32>,
    %c0_7 = arith.constant 0 : index
    %c0_8 = arith.constant 0 : index
    %c0_9 = arith.constant 0 : index
    %c0_10 = arith.constant 0 : index
    %4 = vector.load %arg11[%c0_7, %c0_8, %c0_9, %c0_10] : memref<1x10x10x8xf32, #tpu.memory_space<vmem>>, vector<1x10x1x8xf32>
    tpu.vector_store %arg11[%c0_7, %c0_8, %c0_9, %c0_10], %1 {strides = array<i32>} : memref<1x10x10x8xf32, #tpu.memory_space<vmem>>, vector<1x10x1x8xf32>,
    %c0_11 = arith.constant 0 : index
    %c0_12 = arith.constant 0 : index
    %c9_13 = arith.constant 9 : index
    %c0_14 = arith.constant 0 : index
    %5 = vector.load %arg11[%c0_11, %c0_12, %c9_13, %c0_14] : memref<1x10x10x8xf32, #tpu.memory_space<vmem>>, vector<1x10x1x8xf32>
    tpu.vector_store %arg11[%c0_11, %c0_12, %c9_13, %c0_14], %1 {strides = array<i32>} : memref<1x10x10x8xf32, #tpu.memory_space<vmem>>, vector<1x10x1x8xf32>,
    %c0_15 = arith.constant 0 : index
    %c0_16 = arith.constant 0 : index
    %c0_17 = arith.constant 0 : index
    %c0_18 = arith.constant 0 : index
    %6 = vector.load %arg1[%c0_15, %c0_16, %c0_17, %c0_18] : memref<1x8x8x8xf32, #tpu.memory_space<vmem>>, vector<1x8x8x8xf32>
    %c0_19 = arith.constant 0 : index
    %c1 = arith.constant 1 : index
    %c1_20 = arith.constant 1 : index
    %c0_21 = arith.constant 0 : index
    %7 = vector.load %arg11[%c0_19, %c1, %c1_20, %c0_21] : memref<1x10x10x8xf32, #tpu.memory_space<vmem>>, vector<1x8x8x8xf32>
    tpu.vector_store %arg11[%c0_19, %c1, %c1_20, %c0_21], %6 {strides = array<i32>} : memref<1x10x10x8xf32, #tpu.memory_space<vmem>>, vector<1x8x8x8xf32>,
    %c0_22 = arith.constant 0 : index
    %c0_23 = arith.constant 0 : index
    %c0_24 = arith.constant 0 : index
    %8 = vector.load %arg2[%c0_22, %c0_23, %c0_24] : memref<3x3x8xf32, #tpu.memory_space<vmem>>, vector<3x3x8xf32>
    %c0_25 = arith.constant 0 : index
    %c0_26 = arith.constant 0 : index
    %9 = vector.load %arg3[%c0_25, %c0_26] : memref<1x8xf32, #tpu.memory_space<vmem>>, vector<1x8xf32>
    %c0_27 = arith.constant 0 : index
    %c0_28 = arith.constant 0 : index
    %c0_29 = arith.constant 0 : index
    %c0_30 = arith.constant 0 : index
    %10 = vector.load %arg11[%c0_27, %c0_28, %c0_29, %c0_30] : memref<1x10x10x8xf32, #tpu.memory_space<vmem>>, vector<1x10x8x8xf32>
    %11 = vector.extract_strided_slice %10 {offsets = [0, 0, 0, 0], sizes = [1, 8, 8, 8], strides = [1, 1, 1, 1]} : vector<1x10x8x8xf32> to vector<1x8x8x8xf32>
    %12 = vector.extract_strided_slice %8 {offsets = [0, 0, 0], sizes = [1, 1, 8], strides = [1, 1, 1]} : vector<3x3x8xf32> to vector<1x1x8xf32>
    %13 = vector.shape_cast %12 : vector<1x1x8xf32> to vector<8xf32>
    %14 = vector.shape_cast %13 : vector<8xf32> to vector<1x1x1x8xf32>
    %15 = vector.broadcast %14 : vector<1x1x1x8xf32> to vector<1x8x8x8xf32>
    %16 = arith.mulf %11, %15 : vector<1x8x8x8xf32>
    %17 = vector.extract_strided_slice %10 {offsets = [0, 1, 0, 0], sizes = [1, 8, 8, 8], strides = [1, 1, 1, 1]} : vector<1x10x8x8xf32> to vector<1x8x8x8xf32>
    %18 = vector.extract_strided_slice %8 {offsets = [1, 0, 0], sizes = [1, 1, 8], strides = [1, 1, 1]} : vector<3x3x8xf32> to vector<1x1x8xf32>
    %19 = vector.shape_cast %18 : vector<1x1x8xf32> to vector<8xf32>
    %20 = vector.shape_cast %19 : vector<8xf32> to vector<1x1x1x8xf32>
    %21 = vector.broadcast %20 : vector<1x1x1x8xf32> to vector<1x8x8x8xf32>
    %22 = arith.mulf %17, %21 : vector<1x8x8x8xf32>
    %23 = arith.addf %16, %22 : vector<1x8x8x8xf32>
    %24 = vector.extract_strided_slice %10 {offsets = [0, 2, 0, 0], sizes = [1, 8, 8, 8], strides = [1, 1, 1, 1]} : vector<1x10x8x8xf32> to vector<1x8x8x8xf32>
    %25 = vector.extract_strided_slice %8 {offsets = [2, 0, 0], sizes = [1, 1, 8], strides = [1, 1, 1]} : vector<3x3x8xf32> to vector<1x1x8xf32>
    %26 = vector.shape_cast %25 : vector<1x1x8xf32> to vector<8xf32>
    %27 = vector.shape_cast %26 : vector<8xf32> to vector<1x1x1x8xf32>
    %28 = vector.broadcast %27 : vector<1x1x1x8xf32> to vector<1x8x8x8xf32>
    %29 = arith.mulf %24, %28 : vector<1x8x8x8xf32>
    %30 = arith.addf %23, %29 : vector<1x8x8x8xf32>
    %c0_31 = arith.constant 0 : index
    %c0_32 = arith.constant 0 : index
    %c1_33 = arith.constant 1 : index
    %c0_34 = arith.constant 0 : index
    %31 = vector.load %arg11[%c0_31, %c0_32, %c1_33, %c0_34] : memref<1x10x10x8xf32, #tpu.memory_space<vmem>>, vector<1x10x8x8xf32>
    %32 = vector.extract_strided_slice %31 {offsets = [0, 0, 0, 0], sizes = [1, 8, 8, 8], strides = [1, 1, 1, 1]} : vector<1x10x8x8xf32> to vector<1x8x8x8xf32>
    %33 = vector.extract_strided_slice %8 {offsets = [0, 1, 0], sizes = [1, 1, 8], strides = [1, 1, 1]} : vector<3x3x8xf32> to vector<1x1x8xf32>
    %34 = vector.shape_cast %33 : vector<1x1x8xf32> to vector<8xf32>
    %35 = vector.shape_cast %34 : vector<8xf32> to vector<1x1x1x8xf32>
    %36 = vector.broadcast %35 : vector<1x1x1x8xf32> to vector<1x8x8x8xf32>
    %37 = arith.mulf %32, %36 : vector<1x8x8x8xf32>
    %38 = arith.addf %30, %37 : vector<1x8x8x8xf32>
    %39 = vector.extract_strided_slice %31 {offsets = [0, 1, 0, 0], sizes = [1, 8, 8, 8], strides = [1, 1, 1, 1]} : vector<1x10x8x8xf32> to vector<1x8x8x8xf32>
    %40 = vector.extract_strided_slice %8 {offsets = [1, 1, 0], sizes = [1, 1, 8], strides = [1, 1, 1]} : vector<3x3x8xf32> to vector<1x1x8xf32>
    %41 = vector.shape_cast %40 : vector<1x1x8xf32> to vector<8xf32>
    %42 = vector.shape_cast %41 : vector<8xf32> to vector<1x1x1x8xf32>
    %43 = vector.broadcast %42 : vector<1x1x1x8xf32> to vector<1x8x8x8xf32>
    %44 = arith.mulf %39, %43 : vector<1x8x8x8xf32>
    %45 = arith.addf %38, %44 : vector<1x8x8x8xf32>
    %46 = vector.extract_strided_slice %31 {offsets = [0, 2, 0, 0], sizes = [1, 8, 8, 8], strides = [1, 1, 1, 1]} : vector<1x10x8x8xf32> to vector<1x8x8x8xf32>
    %47 = vector.extract_strided_slice %8 {offsets = [2, 1, 0], sizes = [1, 1, 8], strides = [1, 1, 1]} : vector<3x3x8xf32> to vector<1x1x8xf32>
    %48 = vector.shape_cast %47 : vector<1x1x8xf32> to vector<8xf32>
    %49 = vector.shape_cast %48 : vector<8xf32> to vector<1x1x1x8xf32>
    %50 = vector.broadcast %49 : vector<1x1x1x8xf32> to vector<1x8x8x8xf32>
    %51 = arith.mulf %46, %50 : vector<1x8x8x8xf32>
    %52 = arith.addf %45, %51 : vector<1x8x8x8xf32>
    %c0_35 = arith.constant 0 : index
    %c0_36 = arith.constant 0 : index
    %c2 = arith.constant 2 : index
    %c0_37 = arith.constant 0 : index
    %53 = vector.load %arg11[%c0_35, %c0_36, %c2, %c0_37] : memref<1x10x10x8xf32, #tpu.memory_space<vmem>>, vector<1x10x8x8xf32>
    %54 = vector.extract_strided_slice %53 {offsets = [0, 0, 0, 0], sizes = [1, 8, 8, 8], strides = [1, 1, 1, 1]} : vector<1x10x8x8xf32> to vector<1x8x8x8xf32>
    %55 = vector.extract_strided_slice %8 {offsets = [0, 2, 0], sizes = [1, 1, 8], strides = [1, 1, 1]} : vector<3x3x8xf32> to vector<1x1x8xf32>
    %56 = vector.shape_cast %55 : vector<1x1x8xf32> to vector<8xf32>
    %57 = vector.shape_cast %56 : vector<8xf32> to vector<1x1x1x8xf32>
    %58 = vector.broadcast %57 : vector<1x1x1x8xf32> to vector<1x8x8x8xf32>
    %59 = arith.mulf %54, %58 : vector<1x8x8x8xf32>
    %60 = arith.addf %52, %59 : vector<1x8x8x8xf32>
    %61 = vector.extract_strided_slice %53 {offsets = [0, 1, 0, 0], sizes = [1, 8, 8, 8], strides = [1, 1, 1, 1]} : vector<1x10x8x8xf32> to vector<1x8x8x8xf32>
    %62 = vector.extract_strided_slice %8 {offsets = [1, 2, 0], sizes = [1, 1, 8], strides = [1, 1, 1]} : vector<3x3x8xf32> to vector<1x1x8xf32>
    %63 = vector.shape_cast %62 : vector<1x1x8xf32> to vector<8xf32>
    %64 = vector.shape_cast %63 : vector<8xf32> to vector<1x1x1x8xf32>
    %65 = vector.broadcast %64 : vector<1x1x1x8xf32> to vector<1x8x8x8xf32>
    %66 = arith.mulf %61, %65 : vector<1x8x8x8xf32>
    %67 = arith.addf %60, %66 : vector<1x8x8x8xf32>
    %68 = vector.extract_strided_slice %53 {offsets = [0, 2, 0, 0], sizes = [1, 8, 8, 8], strides = [1, 1, 1, 1]} : vector<1x10x8x8xf32> to vector<1x8x8x8xf32>
    %69 = vector.extract_strided_slice %8 {offsets = [2, 2, 0], sizes = [1, 1, 8], strides = [1, 1, 1]} : vector<3x3x8xf32> to vector<1x1x8xf32>
    %70 = vector.shape_cast %69 : vector<1x1x8xf32> to vector<8xf32>
    %71 = vector.shape_cast %70 : vector<8xf32> to vector<1x1x1x8xf32>
    %72 = vector.broadcast %71 : vector<1x1x1x8xf32> to vector<1x8x8x8xf32>
    %73 = arith.mulf %68, %72 : vector<1x8x8x8xf32>
    %74 = arith.addf %67, %73 : vector<1x8x8x8xf32>
    %75 = vector.shape_cast %9 : vector<1x8xf32> to vector<1x1x1x8xf32>
    %76 = vector.broadcast %75 : vector<1x1x1x8xf32> to vector<1x8x8x8xf32>
    %77 = arith.addf %74, %76 : vector<1x8x8x8xf32>
    %cst_38 = arith.constant 0.000000e+00 : f32
    %78 = vector.broadcast %cst_38 : f32 to vector<1x8x8x8xf32>
    %79 = arith.maximumf %77, %78 : vector<1x8x8x8xf32>
    %c0_39 = arith.constant 0 : index
    %c0_40 = arith.constant 0 : index
    %80 = vector.load %arg4[%c0_39, %c0_40] : memref<8x8xf32, #tpu.memory_space<vmem>>, vector<8x8xf32>
    %c0_41 = arith.constant 0 : index
    %c0_42 = arith.constant 0 : index
    %81 = vector.load %arg5[%c0_41, %c0_42] : memref<1x8xf32, #tpu.memory_space<vmem>>, vector<1x8xf32>
    %82 = vector.shape_cast %79 : vector<1x8x8x8xf32> to vector<64x8xf32>
    %cst_43 = arith.constant dense<0.000000e+00> : vector<64x8xf32>
    %83 = tpu.matmul %82, %80, %cst_43 {dimension_numbers = #tpu.dot_dimension_numbers<[1], [0], [0], [1], [0, 0, 1, 1], [], []>} : vector<64x8xf32>, vector<8x8xf32>, vector<64x8xf32> -> vector<64x8xf32>
    %84 = vector.broadcast %81 : vector<1x8xf32> to vector<64x8xf32>
    %85 = arith.addf %83, %84 : vector<64x8xf32>
    %cst_44 = arith.constant 0.000000e+00 : f32
    %86 = vector.broadcast %cst_44 : f32 to vector<64x8xf32>
    %87 = arith.maximumf %85, %86 : vector<64x8xf32>
    %88 = vector.shape_cast %87 : vector<64x8xf32> to vector<1x8x8x8xf32>
    %c0_45 = arith.constant 0 : index
    %c1_46 = arith.constant 1 : index
    %c1_47 = arith.constant 1 : index
    %c0_48 = arith.constant 0 : index
    %89 = vector.load %arg11[%c0_45, %c1_46, %c1_47, %c0_48] : memref<1x10x10x8xf32, #tpu.memory_space<vmem>>, vector<1x8x8x8xf32>
    tpu.vector_store %arg11[%c0_45, %c1_46, %c1_47, %c0_48], %88 {strides = array<i32>} : memref<1x10x10x8xf32, #tpu.memory_space<vmem>>, vector<1x8x8x8xf32>,
    %c0_49 = arith.constant 0 : index
    %c0_50 = arith.constant 0 : index
    %c0_51 = arith.constant 0 : index
    %90 = vector.load %arg6[%c0_49, %c0_50, %c0_51] : memref<3x3x8xf32, #tpu.memory_space<vmem>>, vector<3x3x8xf32>
    %c0_52 = arith.constant 0 : index
    %c0_53 = arith.constant 0 : index
    %91 = vector.load %arg7[%c0_52, %c0_53] : memref<1x8xf32, #tpu.memory_space<vmem>>, vector<1x8xf32>
    %c0_54 = arith.constant 0 : index
    %c0_55 = arith.constant 0 : index
    %c0_56 = arith.constant 0 : index
    %c0_57 = arith.constant 0 : index
    %92 = vector.load %arg11[%c0_54, %c0_55, %c0_56, %c0_57] : memref<1x10x10x8xf32, #tpu.memory_space<vmem>>, vector<1x10x8x8xf32>
    %93 = vector.extract_strided_slice %92 {offsets = [0, 0, 0, 0], sizes = [1, 8, 8, 8], strides = [1, 1, 1, 1]} : vector<1x10x8x8xf32> to vector<1x8x8x8xf32>
    %94 = vector.extract_strided_slice %90 {offsets = [0, 0, 0], sizes = [1, 1, 8], strides = [1, 1, 1]} : vector<3x3x8xf32> to vector<1x1x8xf32>
    %95 = vector.shape_cast %94 : vector<1x1x8xf32> to vector<8xf32>
    %96 = vector.shape_cast %95 : vector<8xf32> to vector<1x1x1x8xf32>
    %97 = vector.broadcast %96 : vector<1x1x1x8xf32> to vector<1x8x8x8xf32>
    %98 = arith.mulf %93, %97 : vector<1x8x8x8xf32>
    %99 = vector.extract_strided_slice %92 {offsets = [0, 1, 0, 0], sizes = [1, 8, 8, 8], strides = [1, 1, 1, 1]} : vector<1x10x8x8xf32> to vector<1x8x8x8xf32>
    %100 = vector.extract_strided_slice %90 {offsets = [1, 0, 0], sizes = [1, 1, 8], strides = [1, 1, 1]} : vector<3x3x8xf32> to vector<1x1x8xf32>
    %101 = vector.shape_cast %100 : vector<1x1x8xf32> to vector<8xf32>
    %102 = vector.shape_cast %101 : vector<8xf32> to vector<1x1x1x8xf32>
    %103 = vector.broadcast %102 : vector<1x1x1x8xf32> to vector<1x8x8x8xf32>
    %104 = arith.mulf %99, %103 : vector<1x8x8x8xf32>
    %105 = arith.addf %98, %104 : vector<1x8x8x8xf32>
    %106 = vector.extract_strided_slice %92 {offsets = [0, 2, 0, 0], sizes = [1, 8, 8, 8], strides = [1, 1, 1, 1]} : vector<1x10x8x8xf32> to vector<1x8x8x8xf32>
    %107 = vector.extract_strided_slice %90 {offsets = [2, 0, 0], sizes = [1, 1, 8], strides = [1, 1, 1]} : vector<3x3x8xf32> to vector<1x1x8xf32>
    %108 = vector.shape_cast %107 : vector<1x1x8xf32> to vector<8xf32>
    %109 = vector.shape_cast %108 : vector<8xf32> to vector<1x1x1x8xf32>
    %110 = vector.broadcast %109 : vector<1x1x1x8xf32> to vector<1x8x8x8xf32>
    %111 = arith.mulf %106, %110 : vector<1x8x8x8xf32>
    %112 = arith.addf %105, %111 : vector<1x8x8x8xf32>
    %c0_58 = arith.constant 0 : index
    %c0_59 = arith.constant 0 : index
    %c1_60 = arith.constant 1 : index
    %c0_61 = arith.constant 0 : index
    %113 = vector.load %arg11[%c0_58, %c0_59, %c1_60, %c0_61] : memref<1x10x10x8xf32, #tpu.memory_space<vmem>>, vector<1x10x8x8xf32>
    %114 = vector.extract_strided_slice %113 {offsets = [0, 0, 0, 0], sizes = [1, 8, 8, 8], strides = [1, 1, 1, 1]} : vector<1x10x8x8xf32> to vector<1x8x8x8xf32>
    %115 = vector.extract_strided_slice %90 {offsets = [0, 1, 0], sizes = [1, 1, 8], strides = [1, 1, 1]} : vector<3x3x8xf32> to vector<1x1x8xf32>
    %116 = vector.shape_cast %115 : vector<1x1x8xf32> to vector<8xf32>
    %117 = vector.shape_cast %116 : vector<8xf32> to vector<1x1x1x8xf32>
    %118 = vector.broadcast %117 : vector<1x1x1x8xf32> to vector<1x8x8x8xf32>
    %119 = arith.mulf %114, %118 : vector<1x8x8x8xf32>
    %120 = arith.addf %112, %119 : vector<1x8x8x8xf32>
    %121 = vector.extract_strided_slice %113 {offsets = [0, 1, 0, 0], sizes = [1, 8, 8, 8], strides = [1, 1, 1, 1]} : vector<1x10x8x8xf32> to vector<1x8x8x8xf32>
    %122 = vector.extract_strided_slice %90 {offsets = [1, 1, 0], sizes = [1, 1, 8], strides = [1, 1, 1]} : vector<3x3x8xf32> to vector<1x1x8xf32>
    %123 = vector.shape_cast %122 : vector<1x1x8xf32> to vector<8xf32>
    %124 = vector.shape_cast %123 : vector<8xf32> to vector<1x1x1x8xf32>
    %125 = vector.broadcast %124 : vector<1x1x1x8xf32> to vector<1x8x8x8xf32>
    %126 = arith.mulf %121, %125 : vector<1x8x8x8xf32>
    %127 = arith.addf %120, %126 : vector<1x8x8x8xf32>
    %128 = vector.extract_strided_slice %113 {offsets = [0, 2, 0, 0], sizes = [1, 8, 8, 8], strides = [1, 1, 1, 1]} : vector<1x10x8x8xf32> to vector<1x8x8x8xf32>
    %129 = vector.extract_strided_slice %90 {offsets = [2, 1, 0], sizes = [1, 1, 8], strides = [1, 1, 1]} : vector<3x3x8xf32> to vector<1x1x8xf32>
    %130 = vector.shape_cast %129 : vector<1x1x8xf32> to vector<8xf32>
    %131 = vector.shape_cast %130 : vector<8xf32> to vector<1x1x1x8xf32>
    %132 = vector.broadcast %131 : vector<1x1x1x8xf32> to vector<1x8x8x8xf32>
    %133 = arith.mulf %128, %132 : vector<1x8x8x8xf32>
    %134 = arith.addf %127, %133 : vector<1x8x8x8xf32>
    %c0_62 = arith.constant 0 : index
    %c0_63 = arith.constant 0 : index
    %c2_64 = arith.constant 2 : index
    %c0_65 = arith.constant 0 : index
    %135 = vector.load %arg11[%c0_62, %c0_63, %c2_64, %c0_65] : memref<1x10x10x8xf32, #tpu.memory_space<vmem>>, vector<1x10x8x8xf32>
    %136 = vector.extract_strided_slice %135 {offsets = [0, 0, 0, 0], sizes = [1, 8, 8, 8], strides = [1, 1, 1, 1]} : vector<1x10x8x8xf32> to vector<1x8x8x8xf32>
    %137 = vector.extract_strided_slice %90 {offsets = [0, 2, 0], sizes = [1, 1, 8], strides = [1, 1, 1]} : vector<3x3x8xf32> to vector<1x1x8xf32>
    %138 = vector.shape_cast %137 : vector<1x1x8xf32> to vector<8xf32>
    %139 = vector.shape_cast %138 : vector<8xf32> to vector<1x1x1x8xf32>
    %140 = vector.broadcast %139 : vector<1x1x1x8xf32> to vector<1x8x8x8xf32>
    %141 = arith.mulf %136, %140 : vector<1x8x8x8xf32>
    %142 = arith.addf %134, %141 : vector<1x8x8x8xf32>
    %143 = vector.extract_strided_slice %135 {offsets = [0, 1, 0, 0], sizes = [1, 8, 8, 8], strides = [1, 1, 1, 1]} : vector<1x10x8x8xf32> to vector<1x8x8x8xf32>
    %144 = vector.extract_strided_slice %90 {offsets = [1, 2, 0], sizes = [1, 1, 8], strides = [1, 1, 1]} : vector<3x3x8xf32> to vector<1x1x8xf32>
    %145 = vector.shape_cast %144 : vector<1x1x8xf32> to vector<8xf32>
    %146 = vector.shape_cast %145 : vector<8xf32> to vector<1x1x1x8xf32>
    %147 = vector.broadcast %146 : vector<1x1x1x8xf32> to vector<1x8x8x8xf32>
    %148 = arith.mulf %143, %147 : vector<1x8x8x8xf32>
    %149 = arith.addf %142, %148 : vector<1x8x8x8xf32>
    %150 = vector.extract_strided_slice %135 {offsets = [0, 2, 0, 0], sizes = [1, 8, 8, 8], strides = [1, 1, 1, 1]} : vector<1x10x8x8xf32> to vector<1x8x8x8xf32>
    %151 = vector.extract_strided_slice %90 {offsets = [2, 2, 0], sizes = [1, 1, 8], strides = [1, 1, 1]} : vector<3x3x8xf32> to vector<1x1x8xf32>
    %152 = vector.shape_cast %151 : vector<1x1x8xf32> to vector<8xf32>
    %153 = vector.shape_cast %152 : vector<8xf32> to vector<1x1x1x8xf32>
    %154 = vector.broadcast %153 : vector<1x1x1x8xf32> to vector<1x8x8x8xf32>
    %155 = arith.mulf %150, %154 : vector<1x8x8x8xf32>
    %156 = arith.addf %149, %155 : vector<1x8x8x8xf32>
    %157 = vector.shape_cast %91 : vector<1x8xf32> to vector<1x1x1x8xf32>
    %158 = vector.broadcast %157 : vector<1x1x1x8xf32> to vector<1x8x8x8xf32>
    %159 = arith.addf %156, %158 : vector<1x8x8x8xf32>
    %cst_66 = arith.constant 0.000000e+00 : f32
    %160 = vector.broadcast %cst_66 : f32 to vector<1x8x8x8xf32>
    %161 = arith.maximumf %159, %160 : vector<1x8x8x8xf32>
    %c0_67 = arith.constant 0 : index
    %c0_68 = arith.constant 0 : index
    %162 = vector.load %arg8[%c0_67, %c0_68] : memref<8x8xf32, #tpu.memory_space<vmem>>, vector<8x8xf32>
    %c0_69 = arith.constant 0 : index
    %c0_70 = arith.constant 0 : index
    %163 = vector.load %arg9[%c0_69, %c0_70] : memref<1x8xf32, #tpu.memory_space<vmem>>, vector<1x8xf32>
    %164 = vector.shape_cast %161 : vector<1x8x8x8xf32> to vector<64x8xf32>
    %cst_71 = arith.constant dense<0.000000e+00> : vector<64x8xf32>
    %165 = tpu.matmul %164, %162, %cst_71 {dimension_numbers = #tpu.dot_dimension_numbers<[1], [0], [0], [1], [0, 0, 1, 1], [], []>} : vector<64x8xf32>, vector<8x8xf32>, vector<64x8xf32> -> vector<64x8xf32>
    %166 = vector.broadcast %163 : vector<1x8xf32> to vector<64x8xf32>
    %167 = arith.addf %165, %166 : vector<64x8xf32>
    %cst_72 = arith.constant 0.000000e+00 : f32
    %168 = vector.broadcast %cst_72 : f32 to vector<64x8xf32>
    %169 = arith.maximumf %167, %168 : vector<64x8xf32>
    %170 = vector.shape_cast %169 : vector<64x8xf32> to vector<1x8x8x8xf32>
    %c0_73 = arith.constant 0 : index
    %c0_74 = arith.constant 0 : index
    %c0_75 = arith.constant 0 : index
    %c0_76 = arith.constant 0 : index
    %171 = vector.load %arg1[%c0_73, %c0_74, %c0_75, %c0_76] : memref<1x8x8x8xf32, #tpu.memory_space<vmem>>, vector<1x8x8x8xf32>
    %172 = arith.addf %170, %171 : vector<1x8x8x8xf32>
    %c0_77 = arith.constant 0 : index
    %c0_78 = arith.constant 0 : index
    %c0_79 = arith.constant 0 : index
    %c0_80 = arith.constant 0 : index
    %173 = vector.load %arg10[%c0_77, %c0_78, %c0_79, %c0_80] : memref<1x8x8x8xf32, #tpu.memory_space<vmem>>, vector<1x8x8x8xf32>
    tpu.vector_store %arg10[%c0_77, %c0_78, %c0_79, %c0_80], %172 {strides = array<i32>} : memref<1x8x8x8xf32, #tpu.memory_space<vmem>>, vector<1x8x8x8xf32>,
    return
  }
  func.func @transform_0(%arg0: i32) -> (i32, i32, i32, i32) {
    %c0_i32 = arith.constant 0 : i32
    %c0_i32_0 = arith.constant 0 : i32
    %c0_i32_1 = arith.constant 0 : i32
    %c0_i32_2 = arith.constant 0 : i32
    return %arg0, %c0_i32, %c0_i32_0, %c0_i32_1 : i32, i32, i32, i32
  }
  func.func @transform_1(%arg0: i32) -> (i32, i32, i32) {
    %c0_i32 = arith.constant 0 : i32
    %c0_i32_0 = arith.constant 0 : i32
    %c0_i32_1 = arith.constant 0 : i32
    %c0_i32_2 = arith.constant 0 : i32
    return %c0_i32, %c0_i32_0, %c0_i32_1 : i32, i32, i32
  }
  func.func @transform_2(%arg0: i32) -> (i32, i32) {
    %c0_i32 = arith.constant 0 : i32
    %c0_i32_0 = arith.constant 0 : i32
    %c0_i32_1 = arith.constant 0 : i32
    return %c0_i32, %c0_i32_0 : i32, i32
  }
  func.func @transform_3(%arg0: i32) -> (i32, i32) {
    %c0_i32 = arith.constant 0 : i32
    %c0_i32_0 = arith.constant 0 : i32
    %c0_i32_1 = arith.constant 0 : i32
    return %c0_i32, %c0_i32_0 : i32, i32
  }
  func.func @transform_4(%arg0: i32) -> (i32, i32) {
    %c0_i32 = arith.constant 0 : i32
    %c0_i32_0 = arith.constant 0 : i32
    %c0_i32_1 = arith.constant 0 : i32
    return %c0_i32, %c0_i32_0 : i32, i32
  }
  func.func @transform_5(%arg0: i32) -> (i32, i32, i32) {
    %c0_i32 = arith.constant 0 : i32
    %c0_i32_0 = arith.constant 0 : i32
    %c0_i32_1 = arith.constant 0 : i32
    %c0_i32_2 = arith.constant 0 : i32
    return %c0_i32, %c0_i32_0, %c0_i32_1 : i32, i32, i32
  }
  func.func @transform_6(%arg0: i32) -> (i32, i32) {
    %c0_i32 = arith.constant 0 : i32
    %c0_i32_0 = arith.constant 0 : i32
    %c0_i32_1 = arith.constant 0 : i32
    return %c0_i32, %c0_i32_0 : i32, i32
  }
  func.func @transform_7(%arg0: i32) -> (i32, i32) {
    %c0_i32 = arith.constant 0 : i32
    %c0_i32_0 = arith.constant 0 : i32
    %c0_i32_1 = arith.constant 0 : i32
    return %c0_i32, %c0_i32_0 : i32, i32
  }
  func.func @transform_8(%arg0: i32) -> (i32, i32) {
    %c0_i32 = arith.constant 0 : i32
    %c0_i32_0 = arith.constant 0 : i32
    %c0_i32_1 = arith.constant 0 : i32
    return %c0_i32, %c0_i32_0 : i32, i32
  }
  func.func @transform_9(%arg0: i32) -> (i32, i32, i32, i32) {
    %c0_i32 = arith.constant 0 : i32
    %c0_i32_0 = arith.constant 0 : i32
    %c0_i32_1 = arith.constant 0 : i32
    %c0_i32_2 = arith.constant 0 : i32
    return %arg0, %c0_i32, %c0_i32_0, %c0_i32_1 : i32, i32, i32, i32
  }
}

</mosaic_0001>

<llo_original>
// kernel: tpu_custom_call.1
$region0: #{tpu_custom_call.1}
  #allocation0 [shape = 'u32[]', space=smem, size = 0x4, offset = 0x4, fixed_abs, tag = 'smem constant byte address 0x4 - core index']
  #allocation1 [shape = 'u32[144,128]{1,0:T(1,128)}', space=vmem, size = 0x12000, scoped, tag = 'internal scratch']
  #allocation2 [shape = 'f32[1,10,10,8]{3,2,1,0:T(8,128)}', space=vmem, size = 0x14000, scoped, tag = 'scratch operand']
  %s0 = inlined_call_operand.hbm [shape: f32[2,8,8,8], index: 0, kind: input, shape index: {}]
  %s1 = inlined_call_operand.hbm [shape: f32[3,3,8], index: 1, kind: input, shape index: {}]
  %s2 = inlined_call_operand.vmem [shape: f32[1,8], index: 2, kind: input, shape index: {}]
  %s3 = inlined_call_operand.hbm [shape: f32[8,8], index: 3, kind: input, shape index: {}]
  %s4 = inlined_call_operand.vmem [shape: f32[1,8], index: 4, kind: input, shape index: {}]
  %s5 = inlined_call_operand.hbm [shape: f32[3,3,8], index: 5, kind: input, shape index: {}]
  %s6 = inlined_call_operand.vmem [shape: f32[1,8], index: 6, kind: input, shape index: {}]
  %s7 = inlined_call_operand.vmem [shape: f32[8,8], index: 7, kind: input, shape index: {}]
  %s8 = inlined_call_operand.vmem [shape: f32[1,8], index: 8, kind: input, shape index: {}]
  %s9 = inlined_call_operand.hbm [shape: f32[2,8,8,8], index: 9, kind: output, shape index: {}]
  %s10 = sld [smem:[#allocation0]]
  $region85: #{tpu_custom_call.1} parent=0
    _
  %s12 = ssub.s32 1, %s10
  %s13 = scalar_select 0, %s12, %s10
  $region1: #{tpu_custom_call.1} parent=0
    #allocation3 [shape = 'u8[65536]{0}', space=vmem, size = 0x10000, scoped, tag = 'input window, operand 0']
    #allocation4 [shape = 's32[2]{0}', space=sflag, size = 0x8, scoped, tag = 'scoped memory for tpu_custom_call.1']
    #allocation5 [shape = 's32[2]{0}', space=sflag, size = 0x8, scoped, tag = 'scoped memory for tpu_custom_call.1']
    #allocation6 [shape = 'u8[6144]{0}', space=vmem, size = 0x1800, scoped, tag = 'input window, operand 1, single buffered']
    #allocation7 [shape = 's32[1]{0}', space=sflag, size = 0x4, scoped, tag = 'scoped memory for tpu_custom_call.1']
    #allocation8 [shape = 'u8[4096]{0}', space=vmem, size = 0x1000, scoped, tag = 'input window, operand 3, single buffered']
    #allocation9 [shape = 'u8[6144]{0}', space=vmem, size = 0x1800, scoped, tag = 'input window, operand 5, single buffered']
    #allocation10 [shape = 's32[1]{0}', space=sflag, size = 0x4, scoped, tag = 'scoped memory for tpu_custom_call.1']
    #allocation11 [shape = 'u8[65536]{0}', space=vmem, size = 0x10000, scoped, tag = 'output window, operand 0']
    %14 = vsyncpa [#allocation4], 0
    %s15 = scalar_lea.sflag [#allocation4], 1
    %16 = vsyncpa %s15, 0
    %17 = vsyncpa [#allocation7], 0
    %18 = vsyncpa [#allocation10], 0
    %19 = vsyncpa [#allocation5], 0
    %s20 = scalar_lea.sflag [#allocation5], 1
    %21 = vsyncpa %s20, 0
    loop: start=0, step=1, limit=4
    $region2: #{tpu_custom_call.1} parent=1 // loop_pre_header
      _
    $region3: #{tpu_custom_call.1} parent=1 // loop_header
      %s23 = sphi 0, %s27
      %p24 = scmp.ge.s32.totalorder %s23, 4
      %s33 = sphi 0, %s35
      %s36 = sphi 0, %s33
      %s37 = sphi 0, %s36
      %s53 = sphi 0, %s37
      %s57 = sphi 0, %s57
      %s59 = sphi 0, %s57
      %s60 = sphi 0, %s59
      %s74 = sphi 0, %s60
      %s78 = sphi 0, %s78
      %s80 = sphi 0, %s78
      %s81 = sphi 0, %s80
      %s95 = sphi 0, %s81
      %s99 = sphi 0, %s99
      %s101 = sphi 0, %s99
      %s102 = sphi 0, %s101
      %s116 = sphi 0, %s102
      %s120 = sphi 0, %s120
      %s122 = sphi 0, %s120
      %s123 = sphi 0, %s122
      %s137 = sphi 0, %s123
      %s141 = sphi 0, %s141
      %s143 = sphi 0, %s141
      %s144 = sphi 0, %s143
      %s158 = sphi 0, %s144
      %s162 = sphi 0, %s162
      %s164 = sphi 0, %s162
      %s165 = sphi 0, %s164
      %s179 = sphi 0, %s165
      %s183 = sphi 0, %s183
      %s185 = sphi 0, %s183
      %s186 = sphi 0, %s185
      %s200 = sphi 0, %s186
      %s204 = sphi 0, %s204
      %s206 = sphi 0, %s204
      %s207 = sphi 0, %s206
      %s221 = sphi 0, %s207
      %s227 = sphi 0, %s229
      %s230 = sphi 0, %s227
      %s231 = sphi 0, %s230
      %s247 = sphi 0, %s231
    $region4: #{tpu_custom_call.1} parent=1 // loop_header_branch
      %26 = sbr.rel (%p24) target = $region8
    $region5: #{tpu_custom_call.1} parent=1 // loop_body
      %s28 = ssub.s32 %s23, 1
      %s29 = ssub.s32 %s23, 2
      %s30 = sadd.s32 %s23, 1
      %s31 = ssub.s32 %s23, %s30
      %p32 = scmp.eq.s32.totalorder %s31, 0
      %s34 = sadd.s32 %s33, 1
      %s35 = scalar_select %p32, %s33, %s34
      %p38 = pneg %p32
      %p39 = scmp.eq.s32.totalorder %s23, 1
      %p40 = por %p38, %p39
      %p41 = scmp.ne.s32.totalorder %s33, %s36
      %p42 = scmp.eq.s32.totalorder %s23, 0
      %p43 = por %p41, %p42
      %p44 = scmp.ne.s32.totalorder %s33, %s36
      %p45 = scmp.eq.s32.totalorder %s28, 1
      %p46 = por %p44, %p45
      %p47 = scmp.ne.s32.totalorder %s36, %s37
      %p48 = scmp.eq.s32.totalorder %s28, 0
      %p49 = por %p47, %p48
      %p50 = scmp.ne.s32.totalorder %s36, %s37
      %p51 = scmp.eq.s32.totalorder %s29, 1
      %p52 = por %p50, %p51
      %p54 = scmp.ne.s32.totalorder %s37, %s53
      %p55 = scmp.eq.s32.totalorder %s29, 0
      %p56 = por %p54, %p55
      %s58 = sadd.s32 %s57, 1
      %p61 = scmp.eq.s32.totalorder %s23, 1
      %p62 = scmp.ne.s32.totalorder %s57, %s59
      %p63 = scmp.eq.s32.totalorder %s23, 0
      %p64 = por %p62, %p63
      %p65 = scmp.ne.s32.totalorder %s57, %s59
      %p66 = scmp.eq.s32.totalorder %s28, 1
      %p67 = por %p65, %p66
      %p68 = scmp.ne.s32.totalorder %s59, %s60
      %p69 = scmp.eq.s32.totalorder %s28, 0
      %p70 = por %p68, %p69
      %p71 = scmp.ne.s32.totalorder %s59, %s60
      %p72 = scmp.eq.s32.totalorder %s29, 1
      %p73 = por %p71, %p72
      %p75 = scmp.ne.s32.totalorder %s60, %s74
      %p76 = scmp.eq.s32.totalorder %s29, 0
      %p77 = por %p75, %p76
      %s79 = sadd.s32 %s78, 1
      %p82 = scmp.eq.s32.totalorder %s23, 1
      %p83 = scmp.ne.s32.totalorder %s78, %s80
      %p84 = scmp.eq.s32.totalorder %s23, 0
      %p85 = por %p83, %p84
      %p86 = scmp.ne.s32.totalorder %s78, %s80
      %p87 = scmp.eq.s32.totalorder %s28, 1
      %p88 = por %p86, %p87
      %p89 = scmp.ne.s32.totalorder %s80, %s81
      %p90 = scmp.eq.s32.totalorder %s28, 0
      %p91 = por %p89, %p90
      %p92 = scmp.ne.s32.totalorder %s80, %s81
      %p93 = scmp.eq.s32.totalorder %s29, 1
      %p94 = por %p92, %p93
      %p96 = scmp.ne.s32.totalorder %s81, %s95
      %p97 = scmp.eq.s32.totalorder %s29, 0
      %p98 = por %p96, %p97
      %s100 = sadd.s32 %s99, 1
      %p103 = scmp.eq.s32.totalorder %s23, 1
      %p104 = scmp.ne.s32.totalorder %s99, %s101
      %p105 = scmp.eq.s32.totalorder %s23, 0
      %p106 = por %p104, %p105
      %p107 = scmp.ne.s32.totalorder %s99, %s101
      %p108 = scmp.eq.s32.totalorder %s28, 1
      %p109 = por %p107, %p108
      %p110 = scmp.ne.s32.totalorder %s101, %s102
      %p111 = scmp.eq.s32.totalorder %s28, 0
      %p112 = por %p110, %p111
      %p113 = scmp.ne.s32.totalorder %s101, %s102
      %p114 = scmp.eq.s32.totalorder %s29, 1
      %p115 = por %p113, %p114
      %p117 = scmp.ne.s32.totalorder %s102, %s116
      %p118 = scmp.eq.s32.totalorder %s29, 0
      %p119 = por %p117, %p118
      %s121 = sadd.s32 %s120, 1
      %p124 = scmp.eq.s32.totalorder %s23, 1
      %p125 = scmp.ne.s32.totalorder %s120, %s122
      %p126 = scmp.eq.s32.totalorder %s23, 0
      %p127 = por %p125, %p126
      %p128 = scmp.ne.s32.totalorder %s120, %s122
      %p129 = scmp.eq.s32.totalorder %s28, 1
      %p130 = por %p128, %p129
      %p131 = scmp.ne.s32.totalorder %s122, %s123
      %p132 = scmp.eq.s32.totalorder %s28, 0
      %p133 = por %p131, %p132
      %p134 = scmp.ne.s32.totalorder %s122, %s123
      %p135 = scmp.eq.s32.totalorder %s29, 1
      %p136 = por %p134, %p135
      %p138 = scmp.ne.s32.totalorder %s123, %s137
      %p139 = scmp.eq.s32.totalorder %s29, 0
      %p140 = por %p138, %p139
      %s142 = sadd.s32 %s141, 1
      %p145 = scmp.eq.s32.totalorder %s23, 1
      %p146 = scmp.ne.s32.totalorder %s141, %s143
      %p147 = scmp.eq.s32.totalorder %s23, 0
      %p148 = por %p146, %p147
      %p149 = scmp.ne.s32.totalorder %s141, %s143
      %p150 = scmp.eq.s32.totalorder %s28, 1
      %p151 = por %p149, %p150
      %p152 = scmp.ne.s32.totalorder %s143, %s144
      %p153 = scmp.eq.s32.totalorder %s28, 0
      %p154 = por %p152, %p153
      %p155 = scmp.ne.s32.totalorder %s143, %s144
      %p156 = scmp.eq.s32.totalorder %s29, 1
      %p157 = por %p155, %p156
      %p159 = scmp.ne.s32.totalorder %s144, %s158
      %p160 = scmp.eq.s32.totalorder %s29, 0
      %p161 = por %p159, %p160
      %s163 = sadd.s32 %s162, 1
      %p166 = scmp.eq.s32.totalorder %s23, 1
      %p167 = scmp.ne.s32.totalorder %s162, %s164
      %p168 = scmp.eq.s32.totalorder %s23, 0
      %p169 = por %p167, %p168
      %p170 = scmp.ne.s32.totalorder %s162, %s164
      %p171 = scmp.eq.s32.totalorder %s28, 1
      %p172 = por %p170, %p171
      %p173 = scmp.ne.s32.totalorder %s164, %s165
      %p174 = scmp.eq.s32.totalorder %s28, 0
      %p175 = por %p173, %p174
      %p176 = scmp.ne.s32.totalorder %s164, %s165
      %p177 = scmp.eq.s32.totalorder %s29, 1
      %p178 = por %p176, %p177
      %p180 = scmp.ne.s32.totalorder %s165, %s179
      %p181 = scmp.eq.s32.totalorder %s29, 0
      %p182 = por %p180, %p181
      %s184 = sadd.s32 %s183, 1
      %p187 = scmp.eq.s32.totalorder %s23, 1
      %p188 = scmp.ne.s32.totalorder %s183, %s185
      %p189 = scmp.eq.s32.totalorder %s23, 0
      %p190 = por %p188, %p189
      %p191 = scmp.ne.s32.totalorder %s183, %s185
      %p192 = scmp.eq.s32.totalorder %s28, 1
      %p193 = por %p191, %p192
      %p194 = scmp.ne.s32.totalorder %s185, %s186
      %p195 = scmp.eq.s32.totalorder %s28, 0
      %p196 = por %p194, %p195
      %p197 = scmp.ne.s32.totalorder %s185, %s186
      %p198 = scmp.eq.s32.totalorder %s29, 1
      %p199 = por %p197, %p198
      %p201 = scmp.ne.s32.totalorder %s186, %s200
      %p202 = scmp.eq.s32.totalorder %s29, 0
      %p203 = por %p201, %p202
      %s205 = sadd.s32 %s204, 1
      %p208 = scmp.eq.s32.totalorder %s23, 1
      %p209 = scmp.ne.s32.totalorder %s204, %s206
      %p210 = scmp.eq.s32.totalorder %s23, 0
      %p211 = por %p209, %p210
      %p212 = scmp.ne.s32.totalorder %s204, %s206
      %p213 = scmp.eq.s32.totalorder %s28, 1
      %p214 = por %p212, %p213
      %p215 = scmp.ne.s32.totalorder %s206, %s207
      %p216 = scmp.eq.s32.totalorder %s28, 0
      %p217 = por %p215, %p216
      %p218 = scmp.ne.s32.totalorder %s206, %s207
      %p219 = scmp.eq.s32.totalorder %s29, 1
      %p220 = por %p218, %p219
      %p222 = scmp.ne.s32.totalorder %s207, %s221
      %p223 = scmp.eq.s32.totalorder %s29, 0
      %p224 = por %p222, %p223
      %s225 = ssub.s32 %s23, %s30
      %p226 = scmp.eq.s32.totalorder %s225, 0
      %s228 = sadd.s32 %s227, 1
      %s229 = scalar_select %p226, %s227, %s228
      %p232 = pneg %p226
      %p233 = scmp.eq.s32.totalorder %s23, 1
      %p234 = por %p232, %p233
      %p235 = scmp.ne.s32.totalorder %s227, %s230
      %p236 = scmp.eq.s32.totalorder %s23, 0
      %p237 = por %p235, %p236
      %p238 = scmp.ne.s32.totalorder %s227, %s230
      %p239 = scmp.eq.s32.totalorder %s28, 1
      %p240 = por %p238, %p239
      %p241 = scmp.ne.s32.totalorder %s230, %s231
      %p242 = scmp.eq.s32.totalorder %s28, 0
      %p243 = por %p241, %p242
      %p244 = scmp.ne.s32.totalorder %s230, %s231
      %p245 = scmp.eq.s32.totalorder %s29, 1
      %p246 = por %p244, %p245
      %p248 = scmp.ne.s32.totalorder %s231, %s247
      %p249 = scmp.eq.s32.totalorder %s29, 0
      %p250 = por %p248, %p249
      %p251 = scmp.le.s32.totalorder 1, %s23
      %p252 = scmp.lt.s32.totalorder %s23, 3
      %p253 = pnand %p251, %p252
      %p254 = pneg %p253
      // Predicated region
      $region9: #{tpu_custom_call.1} parent=5 // pred_check
        _
      $region10: #{tpu_custom_call.1} parent=5 // pred_check_branch
        %256 = sbr.rel (%p253) target = $region12
      $region11: #{tpu_custom_call.1} parent=5 // pred_region
        %s257 = ssub.s32 %s23, 1
        // Predicated region
        $region13: #{tpu_custom_call.1} parent=11 // pred_check
          %p258 = pneg %p70
        $region14: #{tpu_custom_call.1} parent=11 // pred_check_branch
          %260 = sbr.rel (%p258) target = $region16
        $region15: #{tpu_custom_call.1} parent=11 // pred_region
          %s262 = ssub.s32 192, 192
          %263 = vsyncadd [#allocation7], %s262
          %s264 = sshll.u32 [#allocation6], 4
          %s265 = int_to_ptr.vmem [resolvable:$true] %s264
          %270 = dma.hbm_to_vmem [thread:$0]  %s1, 192, %s265, [#allocation7], 64, 64, 4
        $region16: #{tpu_custom_call.1} parent=11 // pred_fallthru
          _
        // Predicated region
        $region17: #{tpu_custom_call.1} parent=11 // pred_check
          %p271 = pneg %p91
        $region18: #{tpu_custom_call.1} parent=11 // pred_check_branch
          %273 = sbr.rel (%p271) target = $region20
        $region19: #{tpu_custom_call.1} parent=11 // pred_region
          _
        $region20: #{tpu_custom_call.1} parent=11 // pred_fallthru
          _
        // Predicated region
        $region21: #{tpu_custom_call.1} parent=11 // pred_check
          %p274 = pneg %p112
        $region22: #{tpu_custom_call.1} parent=11 // pred_check_branch
          %276 = sbr.rel (%p274) target = $region24
        $region23: #{tpu_custom_call.1} parent=11 // pred_region
          %s278 = ssub.s32 128, 128
          %279 = vsyncadd [#allocation7], %s278
          %s281 = sshll.u32 [#allocation8], 4
          %s282 = int_to_ptr.vmem [resolvable:$true] %s281
          %284 = dma.hbm_to_vmem [thread:$0]  %s3, 128, %s282, [#allocation7]
        $region24: #{tpu_custom_call.1} parent=11 // pred_fallthru
          _
        // Predicated region
        $region25: #{tpu_custom_call.1} parent=11 // pred_check
          %p285 = pneg %p133
        $region26: #{tpu_custom_call.1} parent=11 // pred_check_branch
          %287 = sbr.rel (%p285) target = $region28
        $region27: #{tpu_custom_call.1} parent=11 // pred_region
          _
        $region28: #{tpu_custom_call.1} parent=11 // pred_fallthru
          _
        // Predicated region
        $region29: #{tpu_custom_call.1} parent=11 // pred_check
          %p288 = pneg %p154
        $region30: #{tpu_custom_call.1} parent=11 // pred_check_branch
          %290 = sbr.rel (%p288) target = $region32
        $region31: #{tpu_custom_call.1} parent=11 // pred_region
          %s292 = ssub.s32 192, 192
          %293 = vsyncadd [#allocation10], %s292
          %s294 = sshll.u32 [#allocation9], 4
          %s295 = int_to_ptr.vmem [resolvable:$true] %s294
          %300 = dma.hbm_to_vmem [thread:$0]  %s5, 192, %s295, [#allocation10], 64, 64, 4
        $region32: #{tpu_custom_call.1} parent=11 // pred_fallthru
          _
        // Predicated region
        $region33: #{tpu_custom_call.1} parent=11 // pred_check
          %p301 = pneg %p175
        $region34: #{tpu_custom_call.1} parent=11 // pred_check_branch
          %303 = sbr.rel (%p301) target = $region36
        $region35: #{tpu_custom_call.1} parent=11 // pred_region
          _
        $region36: #{tpu_custom_call.1} parent=11 // pred_fallthru
          _
        // Predicated region
        $region37: #{tpu_custom_call.1} parent=11 // pred_check
          %p304 = pneg %p196
        $region38: #{tpu_custom_call.1} parent=11 // pred_check_branch
          %306 = sbr.rel (%p304) target = $region40
        $region39: #{tpu_custom_call.1} parent=11 // pred_region
          _
        $region40: #{tpu_custom_call.1} parent=11 // pred_fallthru
          _
        // Predicated region
        $region41: #{tpu_custom_call.1} parent=11 // pred_check
          %p307 = pneg %p217
        $region42: #{tpu_custom_call.1} parent=11 // pred_check_branch
          %309 = sbr.rel (%p307) target = $region44
        $region43: #{tpu_custom_call.1} parent=11 // pred_region
          _
        $region44: #{tpu_custom_call.1} parent=11 // pred_fallthru
          _
      $region12: #{tpu_custom_call.1} parent=5 // pred_fallthru
        _
      %p310 = scmp.lt.s32.totalorder %s23, 2
      // Predicated region
      $region45: #{tpu_custom_call.1} parent=5 // pred_check
        %p311 = pneg %p310
      $region46: #{tpu_custom_call.1} parent=5 // pred_check_branch
        %313 = sbr.rel (%p311) target = $region48
      $region47: #{tpu_custom_call.1} parent=5 // pred_region
        // Predicated region
        $region49: #{tpu_custom_call.1} parent=47 // pred_check
          %p314 = pneg %p43
        $region50: #{tpu_custom_call.1} parent=47 // pred_check_branch
          %316 = sbr.rel (%p314) target = $region52
        $region51: #{tpu_custom_call.1} parent=47 // pred_region
          %s317 = sand.u32 %s33, 1
          %s318 = scalar_lea.sflag [#allocation4], %s317
          %s319 = sand.u32 %s33, 1
          %s320 = smul.addr %s319, 64
          %s321 = scalar_lea.vmem [#allocation3], %s320
          %s323 = ssub.s32 1024, 1024
          %324 = vsyncadd %s318, %s323
          %s325 = smul.addr %s23, 8
          %s326 = smul.addr %s325, 128
          %s327 = scalar_lea.hbm %s0, %s326
          %s328 = sshll.u32 %s321, 4
          %s329 = int_to_ptr.vmem [resolvable:$true] %s328
          %334 = dma.hbm_to_vmem [thread:$0]  %s327, 1024, %s329, %s318, 128, 128, 8
        $region52: #{tpu_custom_call.1} parent=47 // pred_fallthru
          _
      $region48: #{tpu_custom_call.1} parent=5 // pred_fallthru
        _
      %p335 = scmp.le.s32.totalorder 1, %s23
      %p336 = scmp.lt.s32.totalorder %s23, 3
      %p337 = pnand %p335, %p336
      %p338 = pneg %p337
      // Predicated region
      $region53: #{tpu_custom_call.1} parent=5 // pred_check
        _
      $region54: #{tpu_custom_call.1} parent=5 // pred_check_branch
        %340 = sbr.rel (%p337) target = $region56
      $region55: #{tpu_custom_call.1} parent=5 // pred_region
        %s341 = ssub.s32 %s23, 1
        %s342 = sand.u32 %s36, 1
        %s343 = scalar_lea.sflag [#allocation4], %s342
        %s344 = sand.u32 %s36, 1
        %s345 = smul.addr %s344, 64
        %s346 = scalar_lea.vmem [#allocation3], %s345
        // Predicated region
        $region57: #{tpu_custom_call.1} parent=55 // pred_check
          %p347 = pneg %p49
        $region58: #{tpu_custom_call.1} parent=55 // pred_check_branch
          %349 = sbr.rel (%p347) target = $region60
        $region59: #{tpu_custom_call.1} parent=55 // pred_region
          %350 = dma.done %s343, 1024
        $region60: #{tpu_custom_call.1} parent=55 // pred_fallthru
          _
        // Predicated region
        $region61: #{tpu_custom_call.1} parent=55 // pred_check
          %p351 = pneg %p70
        $region62: #{tpu_custom_call.1} parent=55 // pred_check_branch
          %353 = sbr.rel (%p351) target = $region64
        $region63: #{tpu_custom_call.1} parent=55 // pred_region
          %354 = dma.done [#allocation7], 192
        $region64: #{tpu_custom_call.1} parent=55 // pred_fallthru
          _
        // Predicated region
        $region65: #{tpu_custom_call.1} parent=55 // pred_check
          %p355 = pneg %p112
        $region66: #{tpu_custom_call.1} parent=55 // pred_check_branch
          %357 = sbr.rel (%p355) target = $region68
        $region67: #{tpu_custom_call.1} parent=55 // pred_region
          %358 = dma.done [#allocation7], 128
        $region68: #{tpu_custom_call.1} parent=55 // pred_fallthru
          _
        // Predicated region
        $region69: #{tpu_custom_call.1} parent=55 // pred_check
          %p359 = pneg %p154
        $region70: #{tpu_custom_call.1} parent=55 // pred_check_branch
          %361 = sbr.rel (%p359) target = $region72
        $region71: #{tpu_custom_call.1} parent=55 // pred_region
          %362 = dma.done [#allocation10], 192
        $region72: #{tpu_custom_call.1} parent=55 // pred_fallthru
          _
        %s363 = sand.u32 %s36, 1
        %s364 = scalar_lea.sflag [#allocation4], %s363
        %s365 = sand.u32 %s36, 1
        %s366 = smul.addr %s365, 64
        %s367 = scalar_lea.vmem [#allocation3], %s366
        %p368 = pneg %p49
        %p369 = pneg %p46
        %p370 = pneg %p70
        %p371 = pneg %p67
        %p372 = pneg %p91
        %p373 = pneg %p88
        %p374 = pneg %p112
        %p375 = pneg %p109
        %p376 = pneg %p133
        %p377 = pneg %p130
        %p378 = pneg %p154
        %p379 = pneg %p151
        %p380 = pneg %p175
        %p381 = pneg %p172
        %p382 = pneg %p196
        %p383 = pneg %p193
        %p384 = pneg %p217
        %p385 = pneg %p214
        %p386 = pneg %p243
        %p387 = pneg %p240
        %s388 = sand.u32 %s230, 1
        %s389 = scalar_lea.sflag [#allocation5], %s388
        %s390 = sand.u32 %s230, 1
        %s391 = smul.addr %s390, 64
        %s392 = scalar_lea.vmem [#allocation11], %s391
        %vm393 = vcmask 64512
        %394 = vst.msk [vmem:[#allocation2] sm:$0xff] %vm393, 0.0
        %vm395 = vcmask 58368
        %396 = vst.msk [vmem:[#allocation2 + $0x8] sm:$0x3] %vm395, 0.0
        %s397 = scalar_lea.vmem [#allocation2], 144
        %398 = vst.msk [vmem:[%s397] sm:$0xff] %vm393, 0.0
        %399 = vst.msk [vmem:[%s397 + $0x8] sm:$0x3] %vm395, 0.0
        %vm400 = vcmask 57344
        %401 = vst.msk [vmem:[#allocation2] sm:$0x1] %vm400, 0.0
        %402 = vst.msk [vmem:[#allocation2 + $0x10] sm:$0x1] %vm400, 0.0
        %403 = vst.msk [vmem:[#allocation2 + $0x20] sm:$0x1] %vm400, 0.0
        %404 = vst.msk [vmem:[#allocation2 + $0x30] sm:$0x1] %vm400, 0.0
        %405 = vst.msk [vmem:[#allocation2 + $0x40] sm:$0x1] %vm400, 0.0
        %406 = vst.msk [vmem:[#allocation2 + $0x50] sm:$0x1] %vm400, 0.0
        %407 = vst.msk [vmem:[#allocation2 + $0x60] sm:$0x1] %vm400, 0.0
        %408 = vst.msk [vmem:[#allocation2 + $0x70] sm:$0x1] %vm400, 0.0
        %409 = vst.msk [vmem:[#allocation2 + $0x80] sm:$0x1] %vm400, 0.0
        %410 = vst.msk [vmem:[#allocation2 + $0x90] sm:$0x1] %vm400, 0.0
        %411 = vst.msk [vmem:[#allocation2 + $0x9] sm:$0x1] %vm400, 0.0
        %412 = vst.msk [vmem:[#allocation2 + $0x19] sm:$0x1] %vm400, 0.0
        %413 = vst.msk [vmem:[#allocation2 + $0x29] sm:$0x1] %vm400, 0.0
        %414 = vst.msk [vmem:[#allocation2 + $0x39] sm:$0x1] %vm400, 0.0
        %415 = vst.msk [vmem:[#allocation2 + $0x49] sm:$0x1] %vm400, 0.0
        %416 = vst.msk [vmem:[#allocation2 + $0x59] sm:$0x1] %vm400, 0.0
        %417 = vst.msk [vmem:[#allocation2 + $0x69] sm:$0x1] %vm400, 0.0
        %418 = vst.msk [vmem:[#allocation2 + $0x79] sm:$0x1] %vm400, 0.0
        %419 = vst.msk [vmem:[#allocation2 + $0x89] sm:$0x1] %vm400, 0.0
        %420 = vst.msk [vmem:[#allocation2 + $0x99] sm:$0x1] %vm400, 0.0
        %v421 = vld [vmem:[%s346] sm:$0xff]
        %v422 = vld [vmem:[%s346 + $0x8] sm:$0xff]
        %v423 = vld [vmem:[%s346 + $0x10] sm:$0xff]
        %v424 = vld [vmem:[%s346 + $0x18] sm:$0xff]
        %v425 = vld [vmem:[%s346 + $0x20] sm:$0xff]
        %v426 = vld [vmem:[%s346 + $0x28] sm:$0xff]
        %v427 = vld [vmem:[%s346 + $0x30] sm:$0xff]
        %v428 = vld [vmem:[%s346 + $0x38] sm:$0xff]
        %s429 = scalar_lea.vmem [#allocation2], 16
        %430 = vst.msk [vmem:[%s429 + $0x1] sm:$0xff] %vm393, %v421
        %431 = vst.msk [vmem:[%s429 + $0x11] sm:$0xff] %vm393, %v422
        %432 = vst.msk [vmem:[%s429 + $0x21] sm:$0xff] %vm393, %v423
        %433 = vst.msk [vmem:[%s429 + $0x31] sm:$0xff] %vm393, %v424
        %434 = vst.msk [vmem:[%s429 + $0x41] sm:$0xff] %vm393, %v425
        %435 = vst.msk [vmem:[%s429 + $0x51] sm:$0xff] %vm393, %v426
        %436 = vst.msk [vmem:[%s429 + $0x61] sm:$0xff] %vm393, %v427
        %437 = vst.msk [vmem:[%s429 + $0x71] sm:$0xff] %vm393, %v428
        %v438 = vld [vmem:[#allocation6] sm:$0x7]
        %v439 = vld [vmem:[#allocation6 + $0x4] sm:$0x7]
        %v440 = vld [vmem:[#allocation6 + $0x8] sm:$0x7]
        %v441 = vld [vmem:[%s2] sm:$0x1]
        %v442 = vld [vmem:[#allocation2] sm:$0xff]
        %v443 = vld [vmem:[#allocation2 + $0x10] sm:$0xff]
        %v444 = vld [vmem:[#allocation2 + $0x20] sm:$0xff]
        %v445 = vld [vmem:[#allocation2 + $0x30] sm:$0xff]
        %v446 = vld [vmem:[#allocation2 + $0x40] sm:$0xff]
        %v447 = vld [vmem:[#allocation2 + $0x50] sm:$0xff]
        %v448 = vld [vmem:[#allocation2 + $0x60] sm:$0xff]
        %v449 = vld [vmem:[#allocation2 + $0x70] sm:$0xff]
        %v450 = vld [vmem:[#allocation2 + $0x80] sm:$0xff]
        %v451 = vld [vmem:[#allocation2 + $0x90] sm:$0xff]
        %v452 = vlaneseq
        %v453 = vshrl.u32 %v452, 7
        %v454 = vsub.s32 0, %v453
        %v455 = vrot.slane %v438, %v454
        %v456 = vmul.f32 %v442, %v455
        %v457 = vmul.f32 %v443, %v455
        %v458 = vmul.f32 %v444, %v455
        %v459 = vmul.f32 %v445, %v455
        %v460 = vmul.f32 %v446, %v455
        %v461 = vmul.f32 %v447, %v455
        %v462 = vmul.f32 %v448, %v455
        %v463 = vmul.f32 %v449, %v455
        %v464 = vlaneseq
        %v465 = vshrl.u32 %v464, 7
        %v466 = vsub.s32 0, %v465
        %v467 = vrot.slane %v439, %v466
        %v468 = vmul.f32 %v443, %v467
        %v469 = vmul.f32 %v444, %v467
        %v470 = vmul.f32 %v445, %v467
        %v471 = vmul.f32 %v446, %v467
        %v472 = vmul.f32 %v447, %v467
        %v473 = vmul.f32 %v448, %v467
        %v474 = vmul.f32 %v449, %v467
        %v475 = vmul.f32 %v450, %v467
        %v476 = vadd.f32 %v456, %v468
        %v477 = vadd.f32 %v457, %v469
        %v478 = vadd.f32 %v458, %v470
        %v479 = vadd.f32 %v459, %v471
        %v480 = vadd.f32 %v460, %v472
        %v481 = vadd.f32 %v461, %v473
        %v482 = vadd.f32 %v462, %v474
        %v483 = vadd.f32 %v463, %v475
        %v484 = vlaneseq
        %v485 = vshrl.u32 %v484, 7
        %v486 = vsub.s32 0, %v485
        %v487 = vrot.slane %v440, %v486
        %v488 = vmul.f32 %v444, %v487
        %v489 = vmul.f32 %v445, %v487
        %v490 = vmul.f32 %v446, %v487
        %v491 = vmul.f32 %v447, %v487
        %v492 = vmul.f32 %v448, %v487
        %v493 = vmul.f32 %v449, %v487
        %v494 = vmul.f32 %v450, %v487
        %v495 = vmul.f32 %v451, %v487
        %v496 = vadd.f32 %v476, %v488
        %v497 = vadd.f32 %v477, %v489
        %v498 = vadd.f32 %v478, %v490
        %v499 = vadd.f32 %v479, %v491
        %v500 = vadd.f32 %v480, %v492
        %v501 = vadd.f32 %v481, %v493
        %v502 = vadd.f32 %v482, %v494
        %v503 = vadd.f32 %v483, %v495
        %v504 = vld [vmem:[#allocation2 + $0x1] sm:$0xff]
        %v505 = vld [vmem:[#allocation2 + $0x11] sm:$0xff]
        %v506 = vld [vmem:[#allocation2 + $0x21] sm:$0xff]
        %v507 = vld [vmem:[#allocation2 + $0x31] sm:$0xff]
        %v508 = vld [vmem:[#allocation2 + $0x41] sm:$0xff]
        %v509 = vld [vmem:[#allocation2 + $0x51] sm:$0xff]
        %v510 = vld [vmem:[#allocation2 + $0x61] sm:$0xff]
        %v511 = vld [vmem:[#allocation2 + $0x71] sm:$0xff]
        %v512 = vld [vmem:[#allocation2 + $0x81] sm:$0xff]
        %v513 = vld [vmem:[#allocation2 + $0x91] sm:$0xff]
        %v514 = vlaneseq
        %v515 = vshrl.u32 %v514, 7
        %v516 = vsub.s32 1, %v515
        %v517 = vrot.slane %v438, %v516
        %v518 = vmul.f32 %v504, %v517
        %v519 = vmul.f32 %v505, %v517
        %v520 = vmul.f32 %v506, %v517
        %v521 = vmul.f32 %v507, %v517
        %v522 = vmul.f32 %v508, %v517
        %v523 = vmul.f32 %v509, %v517
        %v524 = vmul.f32 %v510, %v517
        %v525 = vmul.f32 %v511, %v517
        %v526 = vadd.f32 %v496, %v518
        %v527 = vadd.f32 %v497, %v519
        %v528 = vadd.f32 %v498, %v520
        %v529 = vadd.f32 %v499, %v521
        %v530 = vadd.f32 %v500, %v522
        %v531 = vadd.f32 %v501, %v523
        %v532 = vadd.f32 %v502, %v524
        %v533 = vadd.f32 %v503, %v525
        %v534 = vlaneseq
        %v535 = vshrl.u32 %v534, 7
        %v536 = vsub.s32 1, %v535
        %v537 = vrot.slane %v439, %v536
        %v538 = vmul.f32 %v505, %v537
        %v539 = vmul.f32 %v506, %v537
        %v540 = vmul.f32 %v507, %v537
        %v541 = vmul.f32 %v508, %v537
        %v542 = vmul.f32 %v509, %v537
        %v543 = vmul.f32 %v510, %v537
        %v544 = vmul.f32 %v511, %v537
        %v545 = vmul.f32 %v512, %v537
        %v546 = vadd.f32 %v526, %v538
        %v547 = vadd.f32 %v527, %v539
        %v548 = vadd.f32 %v528, %v540
        %v549 = vadd.f32 %v529, %v541
        %v550 = vadd.f32 %v530, %v542
        %v551 = vadd.f32 %v531, %v543
        %v552 = vadd.f32 %v532, %v544
        %v553 = vadd.f32 %v533, %v545
        %v554 = vlaneseq
        %v555 = vshrl.u32 %v554, 7
        %v556 = vsub.s32 1, %v555
        %v557 = vrot.slane %v440, %v556
        %v558 = vmul.f32 %v506, %v557
        %v559 = vmul.f32 %v507, %v557
        %v560 = vmul.f32 %v508, %v557
        %v561 = vmul.f32 %v509, %v557
        %v562 = vmul.f32 %v510, %v557
        %v563 = vmul.f32 %v511, %v557
        %v564 = vmul.f32 %v512, %v557
        %v565 = vmul.f32 %v513, %v557
        %v566 = vadd.f32 %v546, %v558
        %v567 = vadd.f32 %v547, %v559
        %v568 = vadd.f32 %v548, %v560
        %v569 = vadd.f32 %v549, %v561
        %v570 = vadd.f32 %v550, %v562
        %v571 = vadd.f32 %v551, %v563
        %v572 = vadd.f32 %v552, %v564
        %v573 = vadd.f32 %v553, %v565
        %v574 = vld [vmem:[#allocation2 + $0x2] sm:$0xff]
        %v575 = vld [vmem:[#allocation2 + $0x12] sm:$0xff]
        %v576 = vld [vmem:[#allocation2 + $0x22] sm:$0xff]
        %v577 = vld [vmem:[#allocation2 + $0x32] sm:$0xff]
        %v578 = vld [vmem:[#allocation2 + $0x42] sm:$0xff]
        %v579 = vld [vmem:[#allocation2 + $0x52] sm:$0xff]
        %v580 = vld [vmem:[#allocation2 + $0x62] sm:$0xff]
        %v581 = vld [vmem:[#allocation2 + $0x72] sm:$0xff]
        %v582 = vld [vmem:[#allocation2 + $0x82] sm:$0xff]
        %v583 = vld [vmem:[#allocation2 + $0x92] sm:$0xff]
        %v584 = vlaneseq
        %v585 = vshrl.u32 %v584, 7
        %v586 = vsub.s32 2, %v585
        %v587 = vrot.slane %v438, %v586
        %v588 = vmul.f32 %v574, %v587
        %v589 = vmul.f32 %v575, %v587
        %v590 = vmul.f32 %v576, %v587
        %v591 = vmul.f32 %v577, %v587
        %v592 = vmul.f32 %v578, %v587
        %v593 = vmul.f32 %v579, %v587
        %v594 = vmul.f32 %v580, %v587
        %v595 = vmul.f32 %v581, %v587
        %v596 = vadd.f32 %v566, %v588
        %v597 = vadd.f32 %v567, %v589
        %v598 = vadd.f32 %v568, %v590
        %v599 = vadd.f32 %v569, %v591
        %v600 = vadd.f32 %v570, %v592
        %v601 = vadd.f32 %v571, %v593
        %v602 = vadd.f32 %v572, %v594
        %v603 = vadd.f32 %v573, %v595
        %v604 = vlaneseq
        %v605 = vshrl.u32 %v604, 7
        %v606 = vsub.s32 2, %v605
        %v607 = vrot.slane %v439, %v606
        %v608 = vmul.f32 %v575, %v607
        %v609 = vmul.f32 %v576, %v607
        %v610 = vmul.f32 %v577, %v607
        %v611 = vmul.f32 %v578, %v607
        %v612 = vmul.f32 %v579, %v607
        %v613 = vmul.f32 %v580, %v607
        %v614 = vmul.f32 %v581, %v607
        %v615 = vmul.f32 %v582, %v607
        %v616 = vadd.f32 %v596, %v608
        %v617 = vadd.f32 %v597, %v609
        %v618 = vadd.f32 %v598, %v610
        %v619 = vadd.f32 %v599, %v611
        %v620 = vadd.f32 %v600, %v612
        %v621 = vadd.f32 %v601, %v613
        %v622 = vadd.f32 %v602, %v614
        %v623 = vadd.f32 %v603, %v615
        %v624 = vlaneseq
        %v625 = vshrl.u32 %v624, 7
        %v626 = vsub.s32 2, %v625
        %v627 = vrot.slane %v440, %v626
        %v628 = vmul.f32 %v576, %v627
        %v629 = vmul.f32 %v577, %v627
        %v630 = vmul.f32 %v578, %v627
        %v631 = vmul.f32 %v579, %v627
        %v632 = vmul.f32 %v580, %v627
        %v633 = vmul.f32 %v581, %v627
        %v634 = vmul.f32 %v582, %v627
        %v635 = vmul.f32 %v583, %v627
        %v636 = vadd.f32 %v616, %v628
        %v637 = vadd.f32 %v617, %v629
        %v638 = vadd.f32 %v618, %v630
        %v639 = vadd.f32 %v619, %v631
        %v640 = vadd.f32 %v620, %v632
        %v641 = vadd.f32 %v621, %v633
        %v642 = vadd.f32 %v622, %v634
        %v643 = vadd.f32 %v623, %v635
        %v645 = vlaneseq
        %v646 = vshrl.u32 %v645, 7
        %v647 = vsub.s32 0, %v646
        %v648 = vrot.slane %v441, %v647
        %v650 = vadd.f32 %v636, %v648
        %v651 = vadd.f32 %v637, %v648
        %v652 = vadd.f32 %v638, %v648
        %v653 = vadd.f32 %v639, %v648
        %v654 = vadd.f32 %v640, %v648
        %v655 = vadd.f32 %v641, %v648
        %v656 = vadd.f32 %v642, %v648
        %v657 = vadd.f32 %v643, %v648
        %v658 = vmax.f32 %v650, 0.0
        %v659 = vmax.f32 %v651, 0.0
        %v660 = vmax.f32 %v652, 0.0
        %v661 = vmax.f32 %v653, 0.0
        %v662 = vmax.f32 %v654, 0.0
        %v663 = vmax.f32 %v655, 0.0
        %v664 = vmax.f32 %v656, 0.0
        %v665 = vmax.f32 %v657, 0.0
        %v666 = vld [vmem:[#allocation8] sm:$0xff]
        %v667 = vld [vmem:[%s4] sm:$0x1]
        %v669 = vlaneseq
        %v670 = vshrl.u32 %v669, 7
        %v671 = vsub.s32 0, %v670
        %v672 = vrot.slane %v667, %v671
        %v675 = vsel %vm393, %v658, 0
        %v678 = vsel %vm393, %v659, 0
        %v681 = vsel %vm393, %v660, 0
        %v684 = vsel %vm393, %v661, 0
        %v687 = vsel %vm393, %v662, 0
        %v690 = vsel %vm393, %v663, 0
        %v693 = vsel %vm393, %v664, 0
        %v696 = vsel %vm393, %v665, 0
        %698 = vmatprep.subr.mxu0 0.0
        %699 = vmatpush1.msra.mxu0 0.0
        %700 = vmatprep.subr.mxu0 0.0
        %701 = vmatpush1.msra.mxu0 0.0
        %702 = vmatprep.subr.mxu0 0.0
        %703 = vmatpush1.msra.mxu0 0.0
        %704 = vmatprep.subr.mxu0 0.0
        %705 = vmatpush1.msra.mxu0 0.0
        %706 = vmatprep.subr.mxu0 0.0
        %707 = vmatpush1.msra.mxu0 0.0
        %708 = vmatprep.subr.mxu0 0.0
        %709 = vmatpush1.msra.mxu0 0.0
        %710 = vmatprep.subr.mxu0 0.0
        %711 = vmatpush1.msra.mxu0 0.0
        %712 = vmatprep.subr.mxu0 0.0
        %713 = vmatpush1.msra.mxu0 0.0
        %714 = vmatprep.subr.mxu0 0.0
        %715 = vmatpush1.msra.mxu0 0.0
        %716 = vmatprep.subr.mxu0 0.0
        %717 = vmatpush1.msra.mxu0 0.0
        %718 = vmatprep.subr.mxu0 0.0
        %719 = vmatpush1.msra.mxu0 0.0
        %720 = vmatprep.subr.mxu0 0.0
        %721 = vmatpush1.msra.mxu0 0.0
        %722 = vmatprep.subr.mxu0 0.0
        %723 = vmatpush1.msra.mxu0 0.0
        %724 = vmatprep.subr.mxu0 0.0
        %725 = vmatpush1.msra.mxu0 0.0
        %726 = vmatprep.subr.mxu0 0.0
        %727 = vmatpush1.msra.mxu0 0.0
        %728 = vmatprep.subr.mxu0 0.0
        %729 = vmatpush1.msra.mxu0 %v666
        %730 = vmatprep.subr.mxu0 0.0
        %731 = vmatpush2.msra.mxu0 0.0
        %732 = vmatprep.subr.mxu0 0.0
        %733 = vmatpush2.msra.mxu0 0.0
        %734 = vmatprep.subr.mxu0 0.0
        %735 = vmatpush2.msra.mxu0 0.0
        %736 = vmatprep.subr.mxu0 0.0
        %737 = vmatpush2.msra.mxu0 0.0
        %738 = vmatprep.subr.mxu0 0.0
        %739 = vmatpush2.msra.mxu0 0.0
        %740 = vmatprep.subr.mxu0 0.0
        %741 = vmatpush2.msra.mxu0 0.0
        %742 = vmatprep.subr.mxu0 0.0
        %743 = vmatpush2.msra.mxu0 0.0
        %744 = vmatprep.subr.mxu0 0.0
        %745 = vmatpush2.msra.mxu0 0.0
        %746 = vmatprep.subr.mxu0 0.0
        %747 = vmatpush2.msra.mxu0 0.0
        %748 = vmatprep.subr.mxu0 0.0
        %749 = vmatpush2.msra.mxu0 0.0
        %750 = vmatprep.subr.mxu0 0.0
        %751 = vmatpush2.msra.mxu0 0.0
        %752 = vmatprep.subr.mxu0 0.0
        %753 = vmatpush2.msra.mxu0 0.0
        %754 = vmatprep.subr.mxu0 0.0
        %755 = vmatpush2.msra.mxu0 0.0
        %756 = vmatprep.subr.mxu0 0.0
        %757 = vmatpush2.msra.mxu0 0.0
        %758 = vmatprep.subr.mxu0 0.0
        %759 = vmatpush2.msra.mxu0 0.0
        %760 = vmatprep.subr.mxu0 0.0
        %761 = vmatpush2.msra.mxu0 0.0
        %762 = vmatprep.mubr.f32.mxu0 0.0
        %763 = vmatmul.mubr.f32.gmra.mxu0 %v675
        %v764 = vpop.f32.mrf.mxu0
        %v765 = vadd.f32 %v672, %v764
        %v766 = vpop.f32.mrf.mxu0
        %767 = vmatprep.mubr.f32.mxu0 0.0
        %768 = vmatmul.mubr.f32.gmra.mxu0 %v678
        %v769 = vpop.f32.mrf.mxu0
        %v770 = vadd.f32 %v672, %v769
        %v771 = vpop.f32.mrf.mxu0
        %772 = vmatprep.mubr.f32.mxu0 0.0
        %773 = vmatmul.mubr.f32.gmra.mxu0 %v681
        %v774 = vpop.f32.mrf.mxu0
        %v775 = vadd.f32 %v672, %v774
        %v776 = vpop.f32.mrf.mxu0
        %777 = vmatprep.mubr.f32.mxu0 0.0
        %778 = vmatmul.mubr.f32.gmra.mxu0 %v684
        %v779 = vpop.f32.mrf.mxu0
        %v780 = vadd.f32 %v672, %v779
        %v781 = vpop.f32.mrf.mxu0
        %782 = vmatprep.mubr.f32.mxu0 0.0
        %783 = vmatmul.mubr.f32.gmra.mxu0 %v687
        %v784 = vpop.f32.mrf.mxu0
        %v785 = vadd.f32 %v672, %v784
        %v786 = vpop.f32.mrf.mxu0
        %787 = vmatprep.mubr.f32.mxu0 0.0
        %788 = vmatmul.mubr.f32.gmra.mxu0 %v690
        %v789 = vpop.f32.mrf.mxu0
        %v790 = vadd.f32 %v672, %v789
        %v791 = vpop.f32.mrf.mxu0
        %792 = vmatprep.mubr.f32.mxu0 0.0
        %793 = vmatmul.mubr.f32.gmra.mxu0 %v693
        %v794 = vpop.f32.mrf.mxu0
        %v795 = vadd.f32 %v672, %v794
        %v796 = vpop.f32.mrf.mxu0
        %797 = vmatprep.mubr.f32.mxu0 0.0
        %798 = vmatmul.mubr.f32.gmra.mxu0 %v696
        %v799 = vpop.f32.mrf.mxu0
        %v800 = vadd.f32 %v672, %v799
        %v801 = vpop.f32.mrf.mxu0
        %802 = vdwg.mxu0
        %v803 = vmax.f32 %v765, 0.0
        %v804 = vmax.f32 %v770, 0.0
        %v805 = vmax.f32 %v775, 0.0
        %v806 = vmax.f32 %v780, 0.0
        %v807 = vmax.f32 %v785, 0.0
        %v808 = vmax.f32 %v790, 0.0
        %v809 = vmax.f32 %v795, 0.0
        %v810 = vmax.f32 %v800, 0.0
        %811 = vst.msk [vmem:[%s429 + $0x1] sm:$0xff] %vm393, %v803
        %812 = vst.msk [vmem:[%s429 + $0x11] sm:$0xff] %vm393, %v804
        %813 = vst.msk [vmem:[%s429 + $0x21] sm:$0xff] %vm393, %v805
        %814 = vst.msk [vmem:[%s429 + $0x31] sm:$0xff] %vm393, %v806
        %815 = vst.msk [vmem:[%s429 + $0x41] sm:$0xff] %vm393, %v807
        %816 = vst.msk [vmem:[%s429 + $0x51] sm:$0xff] %vm393, %v808
        %817 = vst.msk [vmem:[%s429 + $0x61] sm:$0xff] %vm393, %v809
        %818 = vst.msk [vmem:[%s429 + $0x71] sm:$0xff] %vm393, %v810
        %v819 = vld [vmem:[#allocation9] sm:$0x7]
        %v820 = vld [vmem:[#allocation9 + $0x4] sm:$0x7]
        %v821 = vld [vmem:[#allocation9 + $0x8] sm:$0x7]
        %v822 = vld [vmem:[%s6] sm:$0x1]
        %v823 = vld [vmem:[#allocation2] sm:$0xff]
        %v824 = vld [vmem:[#allocation2 + $0x10] sm:$0xff]
        %v825 = vld [vmem:[#allocation2 + $0x20] sm:$0xff]
        %v826 = vld [vmem:[#allocation2 + $0x30] sm:$0xff]
        %v827 = vld [vmem:[#allocation2 + $0x40] sm:$0xff]
        %v828 = vld [vmem:[#allocation2 + $0x50] sm:$0xff]
        %v829 = vld [vmem:[#allocation2 + $0x60] sm:$0xff]
        %v830 = vld [vmem:[#allocation2 + $0x70] sm:$0xff]
        %v831 = vld [vmem:[#allocation2 + $0x80] sm:$0xff]
        %v832 = vld [vmem:[#allocation2 + $0x90] sm:$0xff]
        %v833 = vlaneseq
        %v834 = vshrl.u32 %v833, 7
        %v835 = vsub.s32 0, %v834
        %v836 = vrot.slane %v819, %v835
        %v837 = vmul.f32 %v823, %v836
        %v838 = vmul.f32 %v824, %v836
        %v839 = vmul.f32 %v825, %v836
        %v840 = vmul.f32 %v826, %v836
        %v841 = vmul.f32 %v827, %v836
        %v842 = vmul.f32 %v828, %v836
        %v843 = vmul.f32 %v829, %v836
        %v844 = vmul.f32 %v830, %v836
        %v845 = vlaneseq
        %v846 = vshrl.u32 %v845, 7
        %v847 = vsub.s32 0, %v846
        %v848 = vrot.slane %v820, %v847
        %v849 = vmul.f32 %v824, %v848
        %v850 = vmul.f32 %v825, %v848
        %v851 = vmul.f32 %v826, %v848
        %v852 = vmul.f32 %v827, %v848
        %v853 = vmul.f32 %v828, %v848
        %v854 = vmul.f32 %v829, %v848
        %v855 = vmul.f32 %v830, %v848
        %v856 = vmul.f32 %v831, %v848
        %v857 = vadd.f32 %v837, %v849
        %v858 = vadd.f32 %v838, %v850
        %v859 = vadd.f32 %v839, %v851
        %v860 = vadd.f32 %v840, %v852
        %v861 = vadd.f32 %v841, %v853
        %v862 = vadd.f32 %v842, %v854
        %v863 = vadd.f32 %v843, %v855
        %v864 = vadd.f32 %v844, %v856
        %v865 = vlaneseq
        %v866 = vshrl.u32 %v865, 7
        %v867 = vsub.s32 0, %v866
        %v868 = vrot.slane %v821, %v867
        %v869 = vmul.f32 %v825, %v868
        %v870 = vmul.f32 %v826, %v868
        %v871 = vmul.f32 %v827, %v868
        %v872 = vmul.f32 %v828, %v868
        %v873 = vmul.f32 %v829, %v868
        %v874 = vmul.f32 %v830, %v868
        %v875 = vmul.f32 %v831, %v868
        %v876 = vmul.f32 %v832, %v868
        %v877 = vadd.f32 %v857, %v869
        %v878 = vadd.f32 %v858, %v870
        %v879 = vadd.f32 %v859, %v871
        %v880 = vadd.f32 %v860, %v872
        %v881 = vadd.f32 %v861, %v873
        %v882 = vadd.f32 %v862, %v874
        %v883 = vadd.f32 %v863, %v875
        %v884 = vadd.f32 %v864, %v876
        %v885 = vld [vmem:[#allocation2 + $0x1] sm:$0xff]
        %v886 = vld [vmem:[#allocation2 + $0x11] sm:$0xff]
        %v887 = vld [vmem:[#allocation2 + $0x21] sm:$0xff]
        %v888 = vld [vmem:[#allocation2 + $0x31] sm:$0xff]
        %v889 = vld [vmem:[#allocation2 + $0x41] sm:$0xff]
        %v890 = vld [vmem:[#allocation2 + $0x51] sm:$0xff]
        %v891 = vld [vmem:[#allocation2 + $0x61] sm:$0xff]
        %v892 = vld [vmem:[#allocation2 + $0x71] sm:$0xff]
        %v893 = vld [vmem:[#allocation2 + $0x81] sm:$0xff]
        %v894 = vld [vmem:[#allocation2 + $0x91] sm:$0xff]
        %v895 = vlaneseq
        %v896 = vshrl.u32 %v895, 7
        %v897 = vsub.s32 1, %v896
        %v898 = vrot.slane %v819, %v897
        %v899 = vmul.f32 %v885, %v898
        %v900 = vmul.f32 %v886, %v898
        %v901 = vmul.f32 %v887, %v898
        %v902 = vmul.f32 %v888, %v898
        %v903 = vmul.f32 %v889, %v898
        %v904 = vmul.f32 %v890, %v898
        %v905 = vmul.f32 %v891, %v898
        %v906 = vmul.f32 %v892, %v898
        %v907 = vadd.f32 %v877, %v899
        %v908 = vadd.f32 %v878, %v900
        %v909 = vadd.f32 %v879, %v901
        %v910 = vadd.f32 %v880, %v902
        %v911 = vadd.f32 %v881, %v903
        %v912 = vadd.f32 %v882, %v904
        %v913 = vadd.f32 %v883, %v905
        %v914 = vadd.f32 %v884, %v906
        %v915 = vlaneseq
        %v916 = vshrl.u32 %v915, 7
        %v917 = vsub.s32 1, %v916
        %v918 = vrot.slane %v820, %v917
        %v919 = vmul.f32 %v886, %v918
        %v920 = vmul.f32 %v887, %v918
        %v921 = vmul.f32 %v888, %v918
        %v922 = vmul.f32 %v889, %v918
        %v923 = vmul.f32 %v890, %v918
        %v924 = vmul.f32 %v891, %v918
        %v925 = vmul.f32 %v892, %v918
        %v926 = vmul.f32 %v893, %v918
        %v927 = vadd.f32 %v907, %v919
        %v928 = vadd.f32 %v908, %v920
        %v929 = vadd.f32 %v909, %v921
        %v930 = vadd.f32 %v910, %v922
        %v931 = vadd.f32 %v911, %v923
        %v932 = vadd.f32 %v912, %v924
        %v933 = vadd.f32 %v913, %v925
        %v934 = vadd.f32 %v914, %v926
        %v935 = vlaneseq
        %v936 = vshrl.u32 %v935, 7
        %v937 = vsub.s32 1, %v936
        %v938 = vrot.slane %v821, %v937
        %v939 = vmul.f32 %v887, %v938
        %v940 = vmul.f32 %v888, %v938
        %v941 = vmul.f32 %v889, %v938
        %v942 = vmul.f32 %v890, %v938
        %v943 = vmul.f32 %v891, %v938
        %v944 = vmul.f32 %v892, %v938
        %v945 = vmul.f32 %v893, %v938
        %v946 = vmul.f32 %v894, %v938
        %v947 = vadd.f32 %v927, %v939
        %v948 = vadd.f32 %v928, %v940
        %v949 = vadd.f32 %v929, %v941
        %v950 = vadd.f32 %v930, %v942
        %v951 = vadd.f32 %v931, %v943
        %v952 = vadd.f32 %v932, %v944
        %v953 = vadd.f32 %v933, %v945
        %v954 = vadd.f32 %v934, %v946
        %v955 = vld [vmem:[#allocation2 + $0x2] sm:$0xff]
        %v956 = vld [vmem:[#allocation2 + $0x12] sm:$0xff]
        %v957 = vld [vmem:[#allocation2 + $0x22] sm:$0xff]
        %v958 = vld [vmem:[#allocation2 + $0x32] sm:$0xff]
        %v959 = vld [vmem:[#allocation2 + $0x42] sm:$0xff]
        %v960 = vld [vmem:[#allocation2 + $0x52] sm:$0xff]
        %v961 = vld [vmem:[#allocation2 + $0x62] sm:$0xff]
        %v962 = vld [vmem:[#allocation2 + $0x72] sm:$0xff]
        %v963 = vld [vmem:[#allocation2 + $0x82] sm:$0xff]
        %v964 = vld [vmem:[#allocation2 + $0x92] sm:$0xff]
        %v965 = vlaneseq
        %v966 = vshrl.u32 %v965, 7
        %v967 = vsub.s32 2, %v966
        %v968 = vrot.slane %v819, %v967
        %v969 = vmul.f32 %v955, %v968
        %v970 = vmul.f32 %v956, %v968
        %v971 = vmul.f32 %v957, %v968
        %v972 = vmul.f32 %v958, %v968
        %v973 = vmul.f32 %v959, %v968
        %v974 = vmul.f32 %v960, %v968
        %v975 = vmul.f32 %v961, %v968
        %v976 = vmul.f32 %v962, %v968
        %v977 = vadd.f32 %v947, %v969
        %v978 = vadd.f32 %v948, %v970
        %v979 = vadd.f32 %v949, %v971
        %v980 = vadd.f32 %v950, %v972
        %v981 = vadd.f32 %v951, %v973
        %v982 = vadd.f32 %v952, %v974
        %v983 = vadd.f32 %v953, %v975
        %v984 = vadd.f32 %v954, %v976
        %v985 = vlaneseq
        %v986 = vshrl.u32 %v985, 7
        %v987 = vsub.s32 2, %v986
        %v988 = vrot.slane %v820, %v987
        %v989 = vmul.f32 %v956, %v988
        %v990 = vmul.f32 %v957, %v988
        %v991 = vmul.f32 %v958, %v988
        %v992 = vmul.f32 %v959, %v988
        %v993 = vmul.f32 %v960, %v988
        %v994 = vmul.f32 %v961, %v988
        %v995 = vmul.f32 %v962, %v988
        %v996 = vmul.f32 %v963, %v988
        %v997 = vadd.f32 %v977, %v989
        %v998 = vadd.f32 %v978, %v990
        %v999 = vadd.f32 %v979, %v991
        %v1000 = vadd.f32 %v980, %v992
        %v1001 = vadd.f32 %v981, %v993
        %v1002 = vadd.f32 %v982, %v994
        %v1003 = vadd.f32 %v983, %v995
        %v1004 = vadd.f32 %v984, %v996
        %v1005 = vlaneseq
        %v1006 = vshrl.u32 %v1005, 7
        %v1007 = vsub.s32 2, %v1006
        %v1008 = vrot.slane %v821, %v1007
        %v1009 = vmul.f32 %v957, %v1008
        %v1010 = vmul.f32 %v958, %v1008
        %v1011 = vmul.f32 %v959, %v1008
        %v1012 = vmul.f32 %v960, %v1008
        %v1013 = vmul.f32 %v961, %v1008
        %v1014 = vmul.f32 %v962, %v1008
        %v1015 = vmul.f32 %v963, %v1008
        %v1016 = vmul.f32 %v964, %v1008
        %v1017 = vadd.f32 %v997, %v1009
        %v1018 = vadd.f32 %v998, %v1010
        %v1019 = vadd.f32 %v999, %v1011
        %v1020 = vadd.f32 %v1000, %v1012
        %v1021 = vadd.f32 %v1001, %v1013
        %v1022 = vadd.f32 %v1002, %v1014
        %v1023 = vadd.f32 %v1003, %v1015
        %v1024 = vadd.f32 %v1004, %v1016
        %v1026 = vlaneseq
        %v1027 = vshrl.u32 %v1026, 7
        %v1028 = vsub.s32 0, %v1027
        %v1029 = vrot.slane %v822, %v1028
        %v1031 = vadd.f32 %v1017, %v1029
        %v1032 = vadd.f32 %v1018, %v1029
        %v1033 = vadd.f32 %v1019, %v1029
        %v1034 = vadd.f32 %v1020, %v1029
        %v1035 = vadd.f32 %v1021, %v1029
        %v1036 = vadd.f32 %v1022, %v1029
        %v1037 = vadd.f32 %v1023, %v1029
        %v1038 = vadd.f32 %v1024, %v1029
        %v1039 = vmax.f32 %v1031, 0.0
        %v1040 = vmax.f32 %v1032, 0.0
        %v1041 = vmax.f32 %v1033, 0.0
        %v1042 = vmax.f32 %v1034, 0.0
        %v1043 = vmax.f32 %v1035, 0.0
        %v1044 = vmax.f32 %v1036, 0.0
        %v1045 = vmax.f32 %v1037, 0.0
        %v1046 = vmax.f32 %v1038, 0.0
        %v1047 = vld [vmem:[%s7] sm:$0xff]
        %v1048 = vld [vmem:[%s8] sm:$0x1]
        %v1050 = vlaneseq
        %v1051 = vshrl.u32 %v1050, 7
        %v1052 = vsub.s32 0, %v1051
        %v1053 = vrot.slane %v1048, %v1052
        %v1056 = vsel %vm393, %v1039, 0
        %v1059 = vsel %vm393, %v1040, 0
        %v1062 = vsel %vm393, %v1041, 0
        %v1065 = vsel %vm393, %v1042, 0
        %v1068 = vsel %vm393, %v1043, 0
        %v1071 = vsel %vm393, %v1044, 0
        %v1074 = vsel %vm393, %v1045, 0
        %v1077 = vsel %vm393, %v1046, 0
        %1079 = vmatprep.subr.mxu0 0.0
        %1080 = vmatpush1.msra.mxu0 0.0
        %1081 = vmatprep.subr.mxu0 0.0
        %1082 = vmatpush1.msra.mxu0 0.0
        %1083 = vmatprep.subr.mxu0 0.0
        %1084 = vmatpush1.msra.mxu0 0.0
        %1085 = vmatprep.subr.mxu0 0.0
        %1086 = vmatpush1.msra.mxu0 0.0
        %1087 = vmatprep.subr.mxu0 0.0
        %1088 = vmatpush1.msra.mxu0 0.0
        %1089 = vmatprep.subr.mxu0 0.0
        %1090 = vmatpush1.msra.mxu0 0.0
        %1091 = vmatprep.subr.mxu0 0.0
        %1092 = vmatpush1.msra.mxu0 0.0
        %1093 = vmatprep.subr.mxu0 0.0
        %1094 = vmatpush1.msra.mxu0 0.0
        %1095 = vmatprep.subr.mxu0 0.0
        %1096 = vmatpush1.msra.mxu0 0.0
        %1097 = vmatprep.subr.mxu0 0.0
        %1098 = vmatpush1.msra.mxu0 0.0
        %1099 = vmatprep.subr.mxu0 0.0
        %1100 = vmatpush1.msra.mxu0 0.0
        %1101 = vmatprep.subr.mxu0 0.0
        %1102 = vmatpush1.msra.mxu0 0.0
        %1103 = vmatprep.subr.mxu0 0.0
        %1104 = vmatpush1.msra.mxu0 0.0
        %1105 = vmatprep.subr.mxu0 0.0
        %1106 = vmatpush1.msra.mxu0 0.0
        %1107 = vmatprep.subr.mxu0 0.0
        %1108 = vmatpush1.msra.mxu0 0.0
        %1109 = vmatprep.subr.mxu0 0.0
        %1110 = vmatpush1.msra.mxu0 %v1047
        %1111 = vmatprep.subr.mxu0 0.0
        %1112 = vmatpush2.msra.mxu0 0.0
        %1113 = vmatprep.subr.mxu0 0.0
        %1114 = vmatpush2.msra.mxu0 0.0
        %1115 = vmatprep.subr.mxu0 0.0
        %1116 = vmatpush2.msra.mxu0 0.0
        %1117 = vmatprep.subr.mxu0 0.0
        %1118 = vmatpush2.msra.mxu0 0.0
        %1119 = vmatprep.subr.mxu0 0.0
        %1120 = vmatpush2.msra.mxu0 0.0
        %1121 = vmatprep.subr.mxu0 0.0
        %1122 = vmatpush2.msra.mxu0 0.0
        %1123 = vmatprep.subr.mxu0 0.0
        %1124 = vmatpush2.msra.mxu0 0.0
        %1125 = vmatprep.subr.mxu0 0.0
        %1126 = vmatpush2.msra.mxu0 0.0
        %1127 = vmatprep.subr.mxu0 0.0
        %1128 = vmatpush2.msra.mxu0 0.0
        %1129 = vmatprep.subr.mxu0 0.0
        %1130 = vmatpush2.msra.mxu0 0.0
        %1131 = vmatprep.subr.mxu0 0.0
        %1132 = vmatpush2.msra.mxu0 0.0
        %1133 = vmatprep.subr.mxu0 0.0
        %1134 = vmatpush2.msra.mxu0 0.0
        %1135 = vmatprep.subr.mxu0 0.0
        %1136 = vmatpush2.msra.mxu0 0.0
        %1137 = vmatprep.subr.mxu0 0.0
        %1138 = vmatpush2.msra.mxu0 0.0
        %1139 = vmatprep.subr.mxu0 0.0
        %1140 = vmatpush2.msra.mxu0 0.0
        %1141 = vmatprep.subr.mxu0 0.0
        %1142 = vmatpush2.msra.mxu0 0.0
        %1143 = vmatprep.mubr.f32.mxu0 0.0
        %1144 = vmatmul.mubr.f32.gmra.mxu0 %v1056
        %v1145 = vpop.f32.mrf.mxu0
        %v1146 = vadd.f32 %v1053, %v1145
        %v1147 = vpop.f32.mrf.mxu0
        %1148 = vmatprep.mubr.f32.mxu0 0.0
        %1149 = vmatmul.mubr.f32.gmra.mxu0 %v1059
        %v1150 = vpop.f32.mrf.mxu0
        %v1151 = vadd.f32 %v1053, %v1150
        %v1152 = vpop.f32.mrf.mxu0
        %1153 = vmatprep.mubr.f32.mxu0 0.0
        %1154 = vmatmul.mubr.f32.gmra.mxu0 %v1062
        %v1155 = vpop.f32.mrf.mxu0
        %v1156 = vadd.f32 %v1053, %v1155
        %v1157 = vpop.f32.mrf.mxu0
        %1158 = vmatprep.mubr.f32.mxu0 0.0
        %1159 = vmatmul.mubr.f32.gmra.mxu0 %v1065
        %v1160 = vpop.f32.mrf.mxu0
        %v1161 = vadd.f32 %v1053, %v1160
        %v1162 = vpop.f32.mrf.mxu0
        %1163 = vmatprep.mubr.f32.mxu0 0.0
        %1164 = vmatmul.mubr.f32.gmra.mxu0 %v1068
        %v1165 = vpop.f32.mrf.mxu0
        %v1166 = vadd.f32 %v1053, %v1165
        %v1167 = vpop.f32.mrf.mxu0
        %1168 = vmatprep.mubr.f32.mxu0 0.0
        %1169 = vmatmul.mubr.f32.gmra.mxu0 %v1071
        %v1170 = vpop.f32.mrf.mxu0
        %v1171 = vadd.f32 %v1053, %v1170
        %v1172 = vpop.f32.mrf.mxu0
        %1173 = vmatprep.mubr.f32.mxu0 0.0
        %1174 = vmatmul.mubr.f32.gmra.mxu0 %v1074
        %v1175 = vpop.f32.mrf.mxu0
        %v1176 = vadd.f32 %v1053, %v1175
        %v1177 = vpop.f32.mrf.mxu0
        %1178 = vmatprep.mubr.f32.mxu0 0.0
        %1179 = vmatmul.mubr.f32.gmra.mxu0 %v1077
        %v1180 = vpop.f32.mrf.mxu0
        %v1181 = vadd.f32 %v1053, %v1180
        %v1182 = vpop.f32.mrf.mxu0
        %1183 = vdwg.mxu0
        %v1184 = vmax.f32 %v1146, 0.0
        %v1185 = vmax.f32 %v1151, 0.0
        %v1186 = vmax.f32 %v1156, 0.0
        %v1187 = vmax.f32 %v1161, 0.0
        %v1188 = vmax.f32 %v1166, 0.0
        %v1189 = vmax.f32 %v1171, 0.0
        %v1190 = vmax.f32 %v1176, 0.0
        %v1191 = vmax.f32 %v1181, 0.0
        %v1192 = vld [vmem:[%s346] sm:$0xff]
        %v1193 = vld [vmem:[%s346 + $0x8] sm:$0xff]
        %v1194 = vld [vmem:[%s346 + $0x10] sm:$0xff]
        %v1195 = vld [vmem:[%s346 + $0x18] sm:$0xff]
        %v1196 = vld [vmem:[%s346 + $0x20] sm:$0xff]
        %v1197 = vld [vmem:[%s346 + $0x28] sm:$0xff]
        %v1198 = vld [vmem:[%s346 + $0x30] sm:$0xff]
        %v1199 = vld [vmem:[%s346 + $0x38] sm:$0xff]
        %v1200 = vadd.f32 %v1184, %v1192
        %v1201 = vadd.f32 %v1185, %v1193
        %v1202 = vadd.f32 %v1186, %v1194
        %v1203 = vadd.f32 %v1187, %v1195
        %v1204 = vadd.f32 %v1188, %v1196
        %v1205 = vadd.f32 %v1189, %v1197
        %v1206 = vadd.f32 %v1190, %v1198
        %v1207 = vadd.f32 %v1191, %v1199
        %1208 = vst.msk [vmem:[%s392] sm:$0xff] %vm393, %v1200
        %1209 = vst.msk [vmem:[%s392 + $0x8] sm:$0xff] %vm393, %v1201
        %1210 = vst.msk [vmem:[%s392 + $0x10] sm:$0xff] %vm393, %v1202
        %1211 = vst.msk [vmem:[%s392 + $0x18] sm:$0xff] %vm393, %v1203
        %1212 = vst.msk [vmem:[%s392 + $0x20] sm:$0xff] %vm393, %v1204
        %1213 = vst.msk [vmem:[%s392 + $0x28] sm:$0xff] %vm393, %v1205
        %1214 = vst.msk [vmem:[%s392 + $0x30] sm:$0xff] %vm393, %v1206
        %1215 = vst.msk [vmem:[%s392 + $0x38] sm:$0xff] %vm393, %v1207
        %s1216 = sand.u32 %s230, 1
        %s1217 = scalar_lea.sflag [#allocation5], %s1216
        %s1218 = sand.u32 %s230, 1
        %s1219 = smul.addr %s1218, 64
        %s1220 = scalar_lea.vmem [#allocation11], %s1219
        // Predicated region
        $region73: #{tpu_custom_call.1} parent=55 // pred_check
          %p1221 = pneg %p240
        $region74: #{tpu_custom_call.1} parent=55 // pred_check_branch
          %1223 = sbr.rel (%p1221) target = $region76
        $region75: #{tpu_custom_call.1} parent=55 // pred_region
          %s1225 = ssub.s32 1024, 1024
          %1226 = vsyncadd %s1217, %s1225
          %s1227 = smul.addr %s28, 8
          %s1228 = smul.addr %s1227, 128
          %s1229 = scalar_lea.hbm %s9, %s1228
          %s1230 = sshll.u32 %s1220, 4
          %s1231 = int_to_ptr.vmem [resolvable:$true] %s1230
          %1236 = dma.vmem_to_hbm [thread:$0]  %s1231, 1024, %s1229, %s1217, 128, 128, 8
        $region76: #{tpu_custom_call.1} parent=55 // pred_fallthru
          _
      $region56: #{tpu_custom_call.1} parent=5 // pred_fallthru
        _
      %p1237 = scmp.le.s32.totalorder 2, %s23
      // Predicated region
      $region77: #{tpu_custom_call.1} parent=5 // pred_check
        %p1238 = pneg %p1237
      $region78: #{tpu_custom_call.1} parent=5 // pred_check_branch
        %1240 = sbr.rel (%p1238) target = $region80
      $region79: #{tpu_custom_call.1} parent=5 // pred_region
        %s1241 = ssub.s32 %s23, 2
        // Predicated region
        $region81: #{tpu_custom_call.1} parent=79 // pred_check
          %p1242 = pneg %p246
        $region82: #{tpu_custom_call.1} parent=79 // pred_check_branch
          %1244 = sbr.rel (%p1242) target = $region84
        $region83: #{tpu_custom_call.1} parent=79 // pred_region
          %s1245 = sand.u32 %s231, 1
          %s1246 = scalar_lea.sflag [#allocation5], %s1245
          %s1247 = sand.u32 %s231, 1
          %s1248 = smul.addr %s1247, 64
          %s1249 = scalar_lea.vmem [#allocation11], %s1248
          %1250 = dma.done %s1246, 1024
        $region84: #{tpu_custom_call.1} parent=79 // pred_fallthru
          _
      $region80: #{tpu_custom_call.1} parent=5 // pred_fallthru
        _
    $region6: #{tpu_custom_call.1} parent=1 // loop_footer
      %s27 = sadd.s32 1, %s23
    $region7: #{tpu_custom_call.1} parent=1 // loop_footer_branch
      %22 = sbr.rel target = $region3
    $region8: #{tpu_custom_call.1} parent=1 // loop_exit
      _
    %1251 = vsyncpa [#allocation4], 1
    %s1252 = scalar_lea.sflag [#allocation4], 1
    %1253 = vsyncpa %s1252, 1
    %1254 = vsyncpa [#allocation7], 1
    %1255 = vsyncpa [#allocation10], 1
    %1256 = vsyncpa [#allocation5], 1
    %s1257 = scalar_lea.sflag [#allocation5], 1
    %1258 = vsyncpa %s1257, 1

</llo_original>
